<compile_context>
chip_gen: v6e
topology: v6e:2x2x1
jax: 0.10.0
libtpu: 0.0.40
codegen_flags: <defaults>
</compile_context>

<pallas_src>
import jax
import jax.numpy as jnp
from jax.experimental import pallas as pl
from jax.experimental.pallas import tpu as pltpu

_NEG = -1e30          # acts as -inf for padded vocab columns; safe in f32 softmax math
_MAX_UNROLL = 16      # fully unroll the recurrence only for short, static T
_FUSED_V_MAX = 2048   # fuse Linear+log_softmax into one kernel up to this padded vocab


def _round_up(x, m):
    return (x + m - 1) // m * m


def _mosaic_params(block_bytes, semantics):
    """CompilerParams with a VMEM limit sized from the per-program blocks."""
    limit = int(min(max(2 * block_bytes + (4 << 20), 32 << 20), 64 << 20))
    return pltpu.CompilerParams(dimension_semantics=semantics,
                                vmem_limit_bytes=limit)


def _batch_tiles(B):
    """Padded batch, per-tile batch, number of batch tiles (>=2 tiles -> v7x megacore)."""
    Bp = _round_up(max(B, 8), 8)
    if Bp >= 16:
        Bp = _round_up(Bp, 16)
        return Bp, Bp // 2, 2
    return Bp, Bp, 1


# ---------------------------------------------------------------------------
# GRU kernels (one batch tile per grid step; 2-D time-major rows inside)
# ---------------------------------------------------------------------------

def _gru_step(gi, h, whh, bhh_b, Hp):
    """One GRU step.  gi: [bt,3Hp] (bf16/f32), h: [bt,Hp] f32 carry."""
    gh = jnp.dot(h.astype(jnp.bfloat16), whh,
                 preferred_element_type=jnp.float32) + bhh_b
    gi = gi.astype(jnp.float32)
    r = jax.nn.sigmoid(gi[:, 0:Hp] + gh[:, 0:Hp])
    z = jax.nn.sigmoid(gi[:, Hp:2 * Hp] + gh[:, Hp:2 * Hp])
    n = jnp.tanh(gi[:, 2 * Hp:3 * Hp] + r * gh[:, 2 * Hp:3 * Hp])
    return (1.0 - z) * n + z * h


def gru_encoder_kernel(x_ref, lens_ref, wih_ref, whh_ref, bih_ref, bhh_ref,
                       hT_ref, gi_ref):
    """Length-masked GRU (pack_padded semantics) returning only the final hidden state.

    x_ref   : [T*bt, Ep]  bf16 embedded inputs, time-major rows (row = t*bt + b)
    lens_ref: [bt, 1]     int32 valid lengths (0 for padded batch rows)
    wih/whh : bf16 [Ep,3Hp] / [Hp,3Hp];  bih/bhh: f32 [1,3Hp]
    hT_ref  : [bt, Hp]    f32 hidden at the last *valid* step per row
    gi_ref  : [T*bt,3Hp]  bf16 VMEM scratch for the hoisted input projection
    """
    bt, Hp = hT_ref.shape
    T = x_ref.shape[0] // bt

    # Hoisted input projection: one big MXU matmul for the whole sequence (off the
    # serial critical path), stored bf16 to halve the VMEM footprint.
    gi_ref[...] = (jnp.dot(x_ref[...], wih_ref[...],
                           preferred_element_type=jnp.float32)
                   + bih_ref[...]).astype(gi_ref.dtype)

    whh = whh_ref[...]                                          # bf16 [Hp, 3Hp]
    bhh_b = jnp.broadcast_to(bhh_ref[...], (bt, 3 * Hp))        # hoisted broadcast
    lens_b = jnp.broadcast_to(lens_ref[...], (bt, Hp))          # hoisted lens broadcast

    h0 = jnp.zeros((bt, Hp), jnp.float32)
    if T <= _MAX_UNROLL:
        h = h0
        for t in range(T):                                      # static unroll
            h_cand = _gru_step(gi_ref[t * bt:(t + 1) * bt, :], h, whh, bhh_b, Hp)
            h = jnp.where(lens_b > t, h_cand, h)                # freeze past length
        hT_ref[...] = h
    else:
        def body(t, h):
            row = pl.multiple_of(t * bt, bt)
            h_cand = _gru_step(gi_ref[pl.ds(row, bt), :], h, whh, bhh_b, Hp)
            return jnp.where(lens_b > t, h_cand, h)
        hT_ref[...] = jax.lax.fori_loop(0, T, body, h0, unroll=2)


def gru_decoder_kernel(x_ref, h0_ref, wih_ref, whh_ref, bih_ref, bhh_ref,
                       out_ref, hT_ref, gi_ref):
    """Full-length GRU (teacher forcing, no masking) emitting every hidden state.

    out_ref : [T*bt, Hp] bf16 per-step hidden states (time-major rows)
    hT_ref  : [bt, Hp]   f32 final hidden state
    """
    bt, Hp = hT_ref.shape
    T = x_ref.shape[0] // bt

    gi_ref[...] = (jnp.dot(x_ref[...], wih_ref[...],
                           preferred_element_type=jnp.float32)
                   + bih_ref[...]).astype(gi_ref.dtype)

    whh = whh_ref[...]
    bhh_b = jnp.broadcast_to(bhh_ref[...], (bt, 3 * Hp))

    h = h0_ref[...]
    if T <= _MAX_UNROLL:
        t = 0
        while t + 1 < T:
            h_a = _gru_step(gi_ref[t * bt:(t + 1) * bt, :], h, whh, bhh_b, Hp)
            h_b = _gru_step(gi_ref[(t + 1) * bt:(t + 2) * bt, :], h_a, whh, bhh_b, Hp)
            # Paired store: one [2*bt, Hp] bf16 slab (full packed vreg tile for bt=8).
            out_ref[t * bt:(t + 2) * bt, :] = jnp.concatenate(
                [h_a.astype(out_ref.dtype), h_b.astype(out_ref.dtype)], axis=0)
            h = h_b
            t += 2
        if t < T:
            h = _gru_step(gi_ref[t * bt:(t + 1) * bt, :], h, whh, bhh_b, Hp)
            out_ref[t * bt:(t + 1) * bt, :] = h.astype(out_ref.dtype)
    else:
        def body(t, h):
            row = pl.multiple_of(t * bt, bt)
            h = _gru_step(gi_ref[pl.ds(row, bt), :], h, whh, bhh_b, Hp)
            out_ref[pl.ds(row, bt), :] = h.astype(out_ref.dtype)
            return h
        h = jax.lax.fori_loop(0, T, body, h, unroll=2)
    hT_ref[...] = h


# ---------------------------------------------------------------------------
# Vocab projection + log_softmax kernels
# ---------------------------------------------------------------------------

def proj_logsoftmax_fused_kernel(x_ref, w_ref, b_ref, out_ref):
    """Linear + log_softmax fused: single write of [tn, Vp] log-probs."""
    logits = jnp.dot(x_ref[...], w_ref[...],
                     preferred_element_type=jnp.float32) + b_ref[...]
    m = jnp.max(logits, axis=-1, keepdims=True)
    lse = m + jnp.log(jnp.sum(jnp.exp(logits - m), axis=-1, keepdims=True))
    out_ref[...] = logits - lse


def proj_lse_kernel(x_ref, w_ref, b_ref, lse_ref, m_sc, l_sc):
    """Pass 1 (large V): online log-sum-exp over vocab tiles; no logits output."""
    j = pl.program_id(1)

    @pl.when(j == 0)
    def _():
        m_sc[...] = jnp.full_like(m_sc, -jnp.inf)
        l_sc[...] = jnp.zeros_like(l_sc)

    logits = jnp.dot(x_ref[...], w_ref[...],
                     preferred_element_type=jnp.float32) + b_ref[...]
    m_prev = m_sc[...]
    m_new = jnp.maximum(m_prev, jnp.max(logits, axis=-1, keepdims=True))
    l_sc[...] = (l_sc[...] * jnp.exp(m_prev - m_new)
                 + jnp.sum(jnp.exp(logits - m_new), axis=-1, keepdims=True))
    m_sc[...] = m_new

    @pl.when(j == pl.num_programs(1) - 1)
    def _():
        lse_ref[...] = m_sc[...] + jnp.log(l_sc[...])


def proj_logp_kernel(x_ref, w_ref, b_ref, lse_ref, out_ref):
    """Pass 2 (large V): recompute x@W per tile and write log-probs directly."""
    logits = jnp.dot(x_ref[...], w_ref[...],
                     preferred_element_type=jnp.float32) + b_ref[...]
    out_ref[...] = logits - lse_ref[...]


# ---------------------------------------------------------------------------
# pallas_call wrappers
# ---------------------------------------------------------------------------

def run_gru_encoder(x, lens, wih, whh, bih, bhh, *, bt):
    num_bt, TB, Ep = x.shape
    Hp = whh.shape[0]
    blk = (TB * Ep * 2 + bt * 128 * 4 + Ep * 3 * Hp * 2 + Hp * 3 * Hp * 2
           + 2 * 3 * Hp * 4 + bt * Hp * 4 + TB * 3 * Hp * 2)
    return pl.pallas_call(
        gru_encoder_kernel,
        out_shape=jax.ShapeDtypeStruct((num_bt, bt, Hp), jnp.float32),
        grid=(num_bt,),
        in_specs=[
            pl.BlockSpec((None, TB, Ep), lambda i: (i, 0, 0)),
            pl.BlockSpec((None, bt, 1), lambda i: (i, 0, 0)),
            pl.BlockSpec((Ep, 3 * Hp), lambda i: (0, 0)),
            pl.BlockSpec((Hp, 3 * Hp), lambda i: (0, 0)),
            pl.BlockSpec((1, 3 * Hp), lambda i: (0, 0)),
            pl.BlockSpec((1, 3 * Hp), lambda i: (0, 0)),
        ],
        out_specs=pl.BlockSpec((None, bt, Hp), lambda i: (i, 0, 0)),
        scratch_shapes=[pltpu.VMEM((TB, 3 * Hp), jnp.bfloat16)],
        compiler_params=_mosaic_params(blk, ("parallel",)),
    )(x, lens, wih, whh, bih, bhh)


def run_gru_decoder(x, h0, wih, whh, bih, bhh, *, bt):
    num_bt, TB, Ep = x.shape
    Hp = whh.shape[0]
    blk = (TB * Ep * 2 + bt * Hp * 4 + Ep * 3 * Hp * 2 + Hp * 3 * Hp * 2
           + 2 * 3 * Hp * 4 + TB * Hp * 2 + bt * Hp * 4 + TB * 3 * Hp * 2)
    return pl.pallas_call(
        gru_decoder_kernel,
        out_shape=(jax.ShapeDtypeStruct((num_bt, TB, Hp), jnp.bfloat16),
                   jax.ShapeDtypeStruct((num_bt, bt, Hp), jnp.float32)),
        grid=(num_bt,),
        in_specs=[
            pl.BlockSpec((None, TB, Ep), lambda i: (i, 0, 0)),
            pl.BlockSpec((None, bt, Hp), lambda i: (i, 0, 0)),
            pl.BlockSpec((Ep, 3 * Hp), lambda i: (0, 0)),
            pl.BlockSpec((Hp, 3 * Hp), lambda i: (0, 0)),
            pl.BlockSpec((1, 3 * Hp), lambda i: (0, 0)),
            pl.BlockSpec((1, 3 * Hp), lambda i: (0, 0)),
        ],
        out_specs=(pl.BlockSpec((None, TB, Hp), lambda i: (i, 0, 0)),
                   pl.BlockSpec((None, bt, Hp), lambda i: (i, 0, 0))),
        scratch_shapes=[pltpu.VMEM((TB, 3 * Hp), jnp.bfloat16)],
        compiler_params=_mosaic_params(blk, ("parallel",)),
    )(x, h0, wih, whh, bih, bhh)


def run_proj_logsoftmax(x, w, b):
    """x: [N, Hp] bf16 (batch-major rows), w: [Hp, Vp] bf16, b: [1, Vp] f32.
    Returns log-probs [Np, Vp] f32 (rows beyond N / cols beyond V are padding)."""
    N, Hp = x.shape
    Vp = w.shape[1]

    tn = min(512, _round_up(N, 8))
    Np = _round_up(N, tn)
    if Np != N:
        x = jnp.pad(x, ((0, Np - N), (0, 0)))
    num_n = Np // tn

    if Vp <= _FUSED_V_MAX:
        # Single fused pass: Linear + log_softmax, one [Np,Vp] write, no logits traffic.
        blk = tn * Hp * 2 + Hp * Vp * 2 + Vp * 4 + tn * Vp * 4
        return pl.pallas_call(
            proj_logsoftmax_fused_kernel,
            out_shape=jax.ShapeDtypeStruct((Np, Vp), jnp.float32),
            grid=(num_n,),
            in_specs=[pl.BlockSpec((tn, Hp), lambda i: (i, 0)),
                      pl.BlockSpec((Hp, Vp), lambda i: (0, 0)),
                      pl.BlockSpec((1, Vp), lambda i: (0, 0))],
            out_specs=pl.BlockSpec((tn, Vp), lambda i: (i, 0)),
            compiler_params=_mosaic_params(blk, ("parallel",)),
        )(x, w, b)

    # Large V: pass 1 computes only lse; pass 2 recomputes x@W and writes logp.
    tv = 512
    Vp2 = _round_up(Vp, tv)
    if Vp2 != Vp:
        w = jnp.pad(w, ((0, 0), (0, Vp2 - Vp)))
        b = jnp.pad(b, ((0, 0), (0, Vp2 - Vp)), constant_values=_NEG)
        Vp = Vp2
    num_v = Vp // tv

    blk1 = tn * Hp * 2 + Hp * tv * 2 + tv * 4 + 3 * tn * 4
    lse = pl.pallas_call(
        proj_lse_kernel,
        out_shape=jax.ShapeDtypeStruct((Np, 1), jnp.float32),
        grid=(num_n, num_v),
        in_specs=[pl.BlockSpec((tn, Hp), lambda i, j: (i, 0)),
                  pl.BlockSpec((Hp, tv), lambda i, j: (0, j)),
                  pl.BlockSpec((1, tv), lambda i, j: (0, j))],
        out_specs=pl.BlockSpec((tn, 1), lambda i, j: (i, 0)),
        scratch_shapes=[pltpu.VMEM((tn, 1), jnp.float32),
                        pltpu.VMEM((tn, 1), jnp.float32)],
        compiler_params=_mosaic_params(blk1, ("parallel", "arbitrary")),
    )(x, w, b)

    blk2 = blk1 + tn * tv * 4
    logp = pl.pallas_call(
        proj_logp_kernel,
        out_shape=jax.ShapeDtypeStruct((Np, Vp), jnp.float32),
        grid=(num_n, num_v),
        in_specs=[pl.BlockSpec((tn, Hp), lambda i, j: (i, 0)),
                  pl.BlockSpec((Hp, tv), lambda i, j: (0, j)),
                  pl.BlockSpec((1, tv), lambda i, j: (0, j)),
                  pl.BlockSpec((tn, 1), lambda i, j: (i, 0))],
        out_specs=pl.BlockSpec((tn, tv), lambda i, j: (i, j)),
        compiler_params=_mosaic_params(blk2, ("parallel", "parallel")),
    )(x, w, b, lse)
    return logp


# ---------------------------------------------------------------------------
# Parameter construction (deterministic, PyTorch-like init ranges, padded layout)
# ---------------------------------------------------------------------------

def init_params(key, vocab, emb_dim, hidden):
    Ep = _round_up(emb_dim, 128)
    Hp = _round_up(hidden, 128)
    Vp = _round_up(vocab, 128)

    ks = jax.random.split(key, 10)
    bound = 1.0 / jnp.sqrt(hidden)

    def u(k, shape):
        return jax.random.uniform(k, shape, jnp.float32, -bound, bound)

    def pad_gate_w(w, n_in, n_in_p):
        # [n_in, 3H] -> [n_in_p, 3*Hp] bf16; each gate slab starts on a 128-lane boundary.
        parts = [jnp.pad(w[:, g * hidden:(g + 1) * hidden],
                         ((0, n_in_p - n_in), (0, Hp - hidden))) for g in range(3)]
        return jnp.concatenate(parts, axis=1).astype(jnp.bfloat16)

    def pad_gate_b(bias):
        parts = [jnp.pad(bias[:, g * hidden:(g + 1) * hidden],
                         ((0, 0), (0, Hp - hidden))) for g in range(3)]
        return jnp.concatenate(parts, axis=1)

    params = {
        "dims": {"V": vocab, "E": emb_dim, "H": hidden, "Ep": Ep, "Hp": Hp, "Vp": Vp},
        # encoder
        "enc_embedding": jnp.pad(jax.random.normal(ks[0], (vocab, emb_dim), jnp.float32),
                                 ((0, 0), (0, Ep - emb_dim))),
        "enc_wih": pad_gate_w(u(ks[1], (emb_dim, 3 * hidden)), emb_dim, Ep),
        "enc_whh": pad_gate_w(u(ks[2], (hidden, 3 * hidden)), hidden, Hp),
        "enc_bih": pad_gate_b(u(ks[3], (1, 3 * hidden))),
        "enc_bhh": pad_gate_b(u(ks[4], (1, 3 * hidden))),
        # decoder
        "dec_embedding": jnp.pad(jax.random.normal(ks[5], (vocab, emb_dim), jnp.float32),
                                 ((0, 0), (0, Ep - emb_dim))),
        "dec_wih": pad_gate_w(u(ks[6], (emb_dim, 3 * hidden)), emb_dim, Ep),
        "dec_whh": pad_gate_w(u(ks[7], (hidden, 3 * hidden)), hidden, Hp),
        "dec_bih": pad_gate_b(u(ks[8], (1, 3 * hidden))),
        "dec_bhh": pad_gate_b(u(ks[9], (1, 3 * hidden))),
        # output projection Linear(hidden, vocab); padded vocab columns get -inf bias.
        "out_w": jnp.pad(u(jax.random.fold_in(key, 123), (hidden, vocab)),
                         ((0, Hp - hidden), (0, Vp - vocab))).astype(jnp.bfloat16),
        "out_b": jnp.pad(u(jax.random.fold_in(key, 456), (1, vocab)),
                         ((0, 0), (0, Vp - vocab)), constant_values=_NEG),
    }
    return params


# ---------------------------------------------------------------------------
# Seq2Seq forward (glue in JAX, hot paths in Pallas)
# ---------------------------------------------------------------------------

def _to_tiled_time_major(emb_bth, Bp, bt, num_bt):
    """[B, T, Ep] f32 -> [num_bt, T*bt, Ep] bf16 (row = t*bt + local batch)."""
    B, T, Ep = emb_bth.shape
    x = jnp.transpose(emb_bth, (1, 0, 2))                       # [T, B, Ep]
    x = jnp.pad(x, ((0, 0), (0, Bp - B), (0, 0))).astype(jnp.bfloat16)
    x = x.reshape(T, num_bt, bt, Ep).transpose(1, 0, 2, 3)      # [num_bt, T, bt, Ep]
    return x.reshape(num_bt, T * bt, Ep)


def seq2seq_forward(params, inputs, target, input_length, target_length):
    # TODO(synk): Encoder/Decoder class bodies are not shown in the spec; this implements
    # the standard seq2seq demo (embed -> GRU, decoder teacher-forced on `target` with
    # encoder_hidden as its initial state, Linear + log_softmax outputs).
    del target_length  # decoder is teacher-forced over the full target sequence
    dims = params["dims"]
    V, H = dims["V"], dims["H"]
    Hp = dims["Hp"]

    B, T_in = inputs.shape
    _, T_out = target.shape
    Bp, bt, num_bt = _batch_tiles(B)

    # ---- Encoder (final hidden only; Seq2Seq.forward discards encoder_outputs) ----
    x_enc = _to_tiled_time_major(params["enc_embedding"][inputs], Bp, bt, num_bt)
    lens = jnp.pad(input_length.astype(jnp.int32), (0, Bp - B))     # padded rows -> len 0
    lens = lens.reshape(num_bt, bt, 1)
    encoder_hidden = run_gru_encoder(
        x_enc, lens, params["enc_wih"], params["enc_whh"],
        params["enc_bih"], params["enc_bhh"], bt=bt)                # [num_bt, bt, Hp]

    # ---- Decoder (teacher forcing over the full target sequence) ----
    x_dec = _to_tiled_time_major(params["dec_embedding"][target], Bp, bt, num_bt)
    dec_out, dec_hT = run_gru_decoder(
        x_dec, encoder_hidden, params["dec_wih"], params["dec_whh"],
        params["dec_bih"], params["dec_bhh"], bt=bt)
    # dec_out: [num_bt, T_out*bt, Hp] bf16, dec_hT: [num_bt, bt, Hp] f32

    # Re-order the small hidden tensor to batch-major rows (b*T_out + t) so the big
    # [*, V] log-prob tensor needs no transpose (its layout comes from the projection).
    dec_bth = dec_out.reshape(num_bt, T_out, bt, Hp).transpose(0, 2, 1, 3)
    x_proj = dec_bth.reshape(Bp * T_out, Hp)

    logp = run_proj_logsoftmax(x_proj, params["out_w"], params["out_b"])    # [Np, Vp]
    Vp = params["out_w"].shape[1]
    decoder_outputs = logp[:Bp * T_out].reshape(Bp, T_out, Vp)[:B, :, :V]   # [B, T_out, V]
    decoder_hidden = dec_hT.reshape(Bp, Hp)[:B, :H][None]                   # [1, B, H]

    return decoder_outputs, decoder_hidden


# ---------------------------------------------------------------------------
# Main
# ---------------------------------------------------------------------------

if __name__ == "__main__":
    key = jax.random.PRNGKey(0)
    B, T_in, T_out = 2, 8, 8
    VOCAB, EMB, HID = 64, 32, 32

    params = init_params(key, VOCAB, EMB, HID)

    k_in, k_tgt = jax.random.split(jax.random.fold_in(key, 7))
    inputs = jax.random.randint(k_in, (B, T_in), 0, VOCAB, dtype=jnp.int32)
    target = jax.random.randint(k_tgt, (B, T_out), 0, VOCAB, dtype=jnp.int32)
    input_length = jnp.array([T_in, T_in - 3], dtype=jnp.int32)   # ragged lengths
    target_length = jnp.array([T_out, T_out], dtype=jnp.int32)

    decoder_outputs, decoder_hidden = seq2seq_forward(
        params, inputs, target, input_length, target_length)
    jax.block_until_ready((decoder_outputs, decoder_hidden))

    assert decoder_outputs.shape == (B, T_out, VOCAB)
    assert decoder_hidden.shape == (1, B, HID)
    assert bool(jnp.isfinite(decoder_outputs).all())
    # log_softmax rows must sum (in prob space) to ~1
    assert jnp.allclose(jnp.exp(decoder_outputs).sum(-1), 1.0, atol=1e-4)

    print("KERNEL_OK")
</pallas_src>

<mosaic_0001>
module attributes {stable_mosaic.version = 11 : i64} {
  func.func @gru_encoder_kernel(%arg0: i32, %arg1: memref<1x64x128xbf16, #tpu.memory_space<vmem>>, %arg2: memref<1x8x1xi32, #tpu.memory_space<vmem>>, %arg3: memref<128x384xbf16, #tpu.memory_space<vmem>>, %arg4: memref<128x384xbf16, #tpu.memory_space<vmem>>, %arg5: memref<1x384xf32, #tpu.memory_space<vmem>>, %arg6: memref<1x384xf32, #tpu.memory_space<vmem>>, %arg7: memref<1x8x128xf32, #tpu.memory_space<vmem>>, %arg8: memref<64x384xbf16, #tpu.memory_space<vmem>>) attributes {dimension_semantics = [#tpu.dimension_semantics<parallel>], iteration_bounds = array<i64: 1>, scalar_prefetch = 0 : i64, scratch_operands = 1 : i64, tpu.core_type = #tpu.core_type<tc>, window_params = [{transform_indices = @transform_0, window_bounds = array<i64: 1, 64, 128>}, {transform_indices = @transform_1, window_bounds = array<i64: 1, 8, 1>}, {pipeline_mode = #tpu.pipeline_mode<synchronous>, transform_indices = @transform_2, window_bounds = array<i64: 128, 384>}, {pipeline_mode = #tpu.pipeline_mode<synchronous>, transform_indices = @transform_3, window_bounds = array<i64: 128, 384>}, {pipeline_mode = #tpu.pipeline_mode<synchronous>, transform_indices = @transform_4, window_bounds = array<i64: 1, 384>}, {pipeline_mode = #tpu.pipeline_mode<synchronous>, transform_indices = @transform_5, window_bounds = array<i64: 1, 384>}, {transform_indices = @transform_6, window_bounds = array<i64: 1, 8, 128>}]} {
    %c0 = arith.constant 0 : index
    %c0_0 = arith.constant 0 : index
    %c0_1 = arith.constant 0 : index
    %0 = vector.load %arg1[%c0, %c0_0, %c0_1] : memref<1x64x128xbf16, #tpu.memory_space<vmem>>, vector<1x64x128xbf16>
    %1 = vector.shape_cast %0 : vector<1x64x128xbf16> to vector<64x128xbf16>
    %c0_2 = arith.constant 0 : index
    %c0_3 = arith.constant 0 : index
    %2 = vector.load %arg3[%c0_2, %c0_3] : memref<128x384xbf16, #tpu.memory_space<vmem>>, vector<128x384xbf16>
    %cst = arith.constant dense<0.000000e+00> : vector<64x384xf32>
    %3 = tpu.matmul %1, %2, %cst {dimension_numbers = #tpu.dot_dimension_numbers<[1], [0], [0], [1], [0, 0, 1, 1], [], []>} : vector<64x128xbf16>, vector<128x384xbf16>, vector<64x384xf32> -> vector<64x384xf32>
    %c0_4 = arith.constant 0 : index
    %c0_5 = arith.constant 0 : index
    %4 = vector.load %arg5[%c0_4, %c0_5] : memref<1x384xf32, #tpu.memory_space<vmem>>, vector<1x384xf32>
    %5 = vector.broadcast %4 : vector<1x384xf32> to vector<64x384xf32>
    %6 = arith.addf %3, %5 : vector<64x384xf32>
    %7 = arith.truncf %6 : vector<64x384xf32> to vector<64x384xbf16>
    %c0_6 = arith.constant 0 : index
    %c0_7 = arith.constant 0 : index
    %8 = vector.load %arg8[%c0_6, %c0_7] : memref<64x384xbf16, #tpu.memory_space<vmem>>, vector<64x384xbf16>
    tpu.vector_store %arg8[%c0_6, %c0_7], %7 {strides = array<i32>} : memref<64x384xbf16, #tpu.memory_space<vmem>>, vector<64x384xbf16>,
    %c0_8 = arith.constant 0 : index
    %c0_9 = arith.constant 0 : index
    %9 = vector.load %arg4[%c0_8, %c0_9] : memref<128x384xbf16, #tpu.memory_space<vmem>>, vector<128x384xbf16>
    %c0_10 = arith.constant 0 : index
    %c0_11 = arith.constant 0 : index
    %10 = vector.load %arg6[%c0_10, %c0_11] : memref<1x384xf32, #tpu.memory_space<vmem>>, vector<1x384xf32>
    %11 = vector.shape_cast %10 : vector<1x384xf32> to vector<1x384xf32>
    %12 = vector.broadcast %11 : vector<1x384xf32> to vector<8x384xf32>
    %c0_12 = arith.constant 0 : index
    %c0_13 = arith.constant 0 : index
    %c0_14 = arith.constant 0 : index
    %13 = vector.load %arg2[%c0_12, %c0_13, %c0_14] : memref<1x8x1xi32, #tpu.memory_space<vmem>>, vector<1x8x1xi32>
    %14 = vector.shape_cast %13 : vector<1x8x1xi32> to vector<8x1xi32>
    %15 = vector.shape_cast %14 : vector<8x1xi32> to vector<8x1xi32>
    %16 = vector.broadcast %15 : vector<8x1xi32> to vector<8x128xi32>
    %cst_15 = arith.constant 0.000000e+00 : f32
    %17 = vector.broadcast %cst_15 : f32 to vector<8x128xf32>
    %c0_16 = arith.constant 0 : index
    %c0_17 = arith.constant 0 : index
    %18 = vector.load %arg8[%c0_16, %c0_17] : memref<64x384xbf16, #tpu.memory_space<vmem>>, vector<8x384xbf16>
    %19 = arith.truncf %17 : vector<8x128xf32> to vector<8x128xbf16>
    %cst_18 = arith.constant dense<0.000000e+00> : vector<8x384xf32>
    %20 = tpu.matmul %19, %9, %cst_18 {dimension_numbers = #tpu.dot_dimension_numbers<[1], [0], [0], [1], [0, 0, 1, 1], [], []>} : vector<8x128xbf16>, vector<128x384xbf16>, vector<8x384xf32> -> vector<8x384xf32>
    %21 = arith.addf %20, %12 : vector<8x384xf32>
    %22 = arith.extf %18 : vector<8x384xbf16> to vector<8x384xf32>
    %23 = vector.extract_strided_slice %22 {offsets = [0, 0], sizes = [8, 128], strides = [1, 1]} : vector<8x384xf32> to vector<8x128xf32>
    %24 = vector.extract_strided_slice %21 {offsets = [0, 0], sizes = [8, 128], strides = [1, 1]} : vector<8x384xf32> to vector<8x128xf32>
    %25 = arith.addf %23, %24 : vector<8x128xf32>
    %26 = arith.negf %25 : vector<8x128xf32>
    %27 = math.exp %26 : vector<8x128xf32>
    %cst_19 = arith.constant 1.000000e+00 : f32
    %28 = vector.broadcast %cst_19 : f32 to vector<8x128xf32>
    %29 = arith.addf %28, %27 : vector<8x128xf32>
    %30 = arith.divf %28, %29 : vector<8x128xf32>
    %31 = vector.extract_strided_slice %22 {offsets = [0, 128], sizes = [8, 128], strides = [1, 1]} : vector<8x384xf32> to vector<8x128xf32>
    %32 = vector.extract_strided_slice %21 {offsets = [0, 128], sizes = [8, 128], strides = [1, 1]} : vector<8x384xf32> to vector<8x128xf32>
    %33 = arith.addf %31, %32 : vector<8x128xf32>
    %34 = arith.negf %33 : vector<8x128xf32>
    %35 = math.exp %34 : vector<8x128xf32>
    %cst_20 = arith.constant 1.000000e+00 : f32
    %36 = vector.broadcast %cst_20 : f32 to vector<8x128xf32>
    %37 = arith.addf %36, %35 : vector<8x128xf32>
    %38 = arith.divf %36, %37 : vector<8x128xf32>
    %39 = vector.extract_strided_slice %22 {offsets = [0, 256], sizes = [8, 128], strides = [1, 1]} : vector<8x384xf32> to vector<8x128xf32>
    %40 = vector.extract_strided_slice %21 {offsets = [0, 256], sizes = [8, 128], strides = [1, 1]} : vector<8x384xf32> to vector<8x128xf32>
    %41 = arith.mulf %30, %40 : vector<8x128xf32>
    %42 = arith.addf %39, %41 : vector<8x128xf32>
    %43 = math.tanh %42 : vector<8x128xf32>
    %cst_21 = arith.constant 1.000000e+00 : f32
    %44 = vector.broadcast %cst_21 : f32 to vector<8x128xf32>
    %45 = arith.subf %44, %38 : vector<8x128xf32>
    %46 = arith.mulf %45, %43 : vector<8x128xf32>
    %47 = arith.mulf %38, %17 : vector<8x128xf32>
    %48 = arith.addf %46, %47 : vector<8x128xf32>
    %c0_i32 = arith.constant 0 : i32
    %49 = vector.broadcast %c0_i32 : i32 to vector<8x128xi32>
    %50 = arith.cmpi sgt, %16, %49 : vector<8x128xi32>
    %51 = arith.select %50, %48, %17 : vector<8x128xi1>, vector<8x128xf32>
    %c8 = arith.constant 8 : index
    %c0_22 = arith.constant 0 : index
    %52 = vector.load %arg8[%c8, %c0_22] : memref<64x384xbf16, #tpu.memory_space<vmem>>, vector<8x384xbf16>
    %53 = arith.truncf %51 : vector<8x128xf32> to vector<8x128xbf16>
    %cst_23 = arith.constant dense<0.000000e+00> : vector<8x384xf32>
    %54 = tpu.matmul %53, %9, %cst_23 {dimension_numbers = #tpu.dot_dimension_numbers<[1], [0], [0], [1], [0, 0, 1, 1], [], []>} : vector<8x128xbf16>, vector<128x384xbf16>, vector<8x384xf32> -> vector<8x384xf32>
    %55 = arith.addf %54, %12 : vector<8x384xf32>
    %56 = arith.extf %52 : vector<8x384xbf16> to vector<8x384xf32>
    %57 = vector.extract_strided_slice %56 {offsets = [0, 0], sizes = [8, 128], strides = [1, 1]} : vector<8x384xf32> to vector<8x128xf32>
    %58 = vector.extract_strided_slice %55 {offsets = [0, 0], sizes = [8, 128], strides = [1, 1]} : vector<8x384xf32> to vector<8x128xf32>
    %59 = arith.addf %57, %58 : vector<8x128xf32>
    %60 = arith.negf %59 : vector<8x128xf32>
    %61 = math.exp %60 : vector<8x128xf32>
    %cst_24 = arith.constant 1.000000e+00 : f32
    %62 = vector.broadcast %cst_24 : f32 to vector<8x128xf32>
    %63 = arith.addf %62, %61 : vector<8x128xf32>
    %64 = arith.divf %62, %63 : vector<8x128xf32>
    %65 = vector.extract_strided_slice %56 {offsets = [0, 128], sizes = [8, 128], strides = [1, 1]} : vector<8x384xf32> to vector<8x128xf32>
    %66 = vector.extract_strided_slice %55 {offsets = [0, 128], sizes = [8, 128], strides = [1, 1]} : vector<8x384xf32> to vector<8x128xf32>
    %67 = arith.addf %65, %66 : vector<8x128xf32>
    %68 = arith.negf %67 : vector<8x128xf32>
    %69 = math.exp %68 : vector<8x128xf32>
    %cst_25 = arith.constant 1.000000e+00 : f32
    %70 = vector.broadcast %cst_25 : f32 to vector<8x128xf32>
    %71 = arith.addf %70, %69 : vector<8x128xf32>
    %72 = arith.divf %70, %71 : vector<8x128xf32>
    %73 = vector.extract_strided_slice %56 {offsets = [0, 256], sizes = [8, 128], strides = [1, 1]} : vector<8x384xf32> to vector<8x128xf32>
    %74 = vector.extract_strided_slice %55 {offsets = [0, 256], sizes = [8, 128], strides = [1, 1]} : vector<8x384xf32> to vector<8x128xf32>
    %75 = arith.mulf %64, %74 : vector<8x128xf32>
    %76 = arith.addf %73, %75 : vector<8x128xf32>
    %77 = math.tanh %76 : vector<8x128xf32>
    %cst_26 = arith.constant 1.000000e+00 : f32
    %78 = vector.broadcast %cst_26 : f32 to vector<8x128xf32>
    %79 = arith.subf %78, %72 : vector<8x128xf32>
    %80 = arith.mulf %79, %77 : vector<8x128xf32>
    %81 = arith.mulf %72, %51 : vector<8x128xf32>
    %82 = arith.addf %80, %81 : vector<8x128xf32>
    %c1_i32 = arith.constant 1 : i32
    %83 = vector.broadcast %c1_i32 : i32 to vector<8x128xi32>
    %84 = arith.cmpi sgt, %16, %83 : vector<8x128xi32>
    %85 = arith.select %84, %82, %51 : vector<8x128xi1>, vector<8x128xf32>
    %c16 = arith.constant 16 : index
    %c0_27 = arith.constant 0 : index
    %86 = vector.load %arg8[%c16, %c0_27] : memref<64x384xbf16, #tpu.memory_space<vmem>>, vector<8x384xbf16>
    %87 = arith.truncf %85 : vector<8x128xf32> to vector<8x128xbf16>
    %cst_28 = arith.constant dense<0.000000e+00> : vector<8x384xf32>
    %88 = tpu.matmul %87, %9, %cst_28 {dimension_numbers = #tpu.dot_dimension_numbers<[1], [0], [0], [1], [0, 0, 1, 1], [], []>} : vector<8x128xbf16>, vector<128x384xbf16>, vector<8x384xf32> -> vector<8x384xf32>
    %89 = arith.addf %88, %12 : vector<8x384xf32>
    %90 = arith.extf %86 : vector<8x384xbf16> to vector<8x384xf32>
    %91 = vector.extract_strided_slice %90 {offsets = [0, 0], sizes = [8, 128], strides = [1, 1]} : vector<8x384xf32> to vector<8x128xf32>
    %92 = vector.extract_strided_slice %89 {offsets = [0, 0], sizes = [8, 128], strides = [1, 1]} : vector<8x384xf32> to vector<8x128xf32>
    %93 = arith.addf %91, %92 : vector<8x128xf32>
    %94 = arith.negf %93 : vector<8x128xf32>
    %95 = math.exp %94 : vector<8x128xf32>
    %cst_29 = arith.constant 1.000000e+00 : f32
    %96 = vector.broadcast %cst_29 : f32 to vector<8x128xf32>
    %97 = arith.addf %96, %95 : vector<8x128xf32>
    %98 = arith.divf %96, %97 : vector<8x128xf32>
    %99 = vector.extract_strided_slice %90 {offsets = [0, 128], sizes = [8, 128], strides = [1, 1]} : vector<8x384xf32> to vector<8x128xf32>
    %100 = vector.extract_strided_slice %89 {offsets = [0, 128], sizes = [8, 128], strides = [1, 1]} : vector<8x384xf32> to vector<8x128xf32>
    %101 = arith.addf %99, %100 : vector<8x128xf32>
    %102 = arith.negf %101 : vector<8x128xf32>
    %103 = math.exp %102 : vector<8x128xf32>
    %cst_30 = arith.constant 1.000000e+00 : f32
    %104 = vector.broadcast %cst_30 : f32 to vector<8x128xf32>
    %105 = arith.addf %104, %103 : vector<8x128xf32>
    %106 = arith.divf %104, %105 : vector<8x128xf32>
    %107 = vector.extract_strided_slice %90 {offsets = [0, 256], sizes = [8, 128], strides = [1, 1]} : vector<8x384xf32> to vector<8x128xf32>
    %108 = vector.extract_strided_slice %89 {offsets = [0, 256], sizes = [8, 128], strides = [1, 1]} : vector<8x384xf32> to vector<8x128xf32>
    %109 = arith.mulf %98, %108 : vector<8x128xf32>
    %110 = arith.addf %107, %109 : vector<8x128xf32>
    %111 = math.tanh %110 : vector<8x128xf32>
    %cst_31 = arith.constant 1.000000e+00 : f32
    %112 = vector.broadcast %cst_31 : f32 to vector<8x128xf32>
    %113 = arith.subf %112, %106 : vector<8x128xf32>
    %114 = arith.mulf %113, %111 : vector<8x128xf32>
    %115 = arith.mulf %106, %85 : vector<8x128xf32>
    %116 = arith.addf %114, %115 : vector<8x128xf32>
    %c2_i32 = arith.constant 2 : i32
    %117 = vector.broadcast %c2_i32 : i32 to vector<8x128xi32>
    %118 = arith.cmpi sgt, %16, %117 : vector<8x128xi32>
    %119 = arith.select %118, %116, %85 : vector<8x128xi1>, vector<8x128xf32>
    %c24 = arith.constant 24 : index
    %c0_32 = arith.constant 0 : index
    %120 = vector.load %arg8[%c24, %c0_32] : memref<64x384xbf16, #tpu.memory_space<vmem>>, vector<8x384xbf16>
    %121 = arith.truncf %119 : vector<8x128xf32> to vector<8x128xbf16>
    %cst_33 = arith.constant dense<0.000000e+00> : vector<8x384xf32>
    %122 = tpu.matmul %121, %9, %cst_33 {dimension_numbers = #tpu.dot_dimension_numbers<[1], [0], [0], [1], [0, 0, 1, 1], [], []>} : vector<8x128xbf16>, vector<128x384xbf16>, vector<8x384xf32> -> vector<8x384xf32>
    %123 = arith.addf %122, %12 : vector<8x384xf32>
    %124 = arith.extf %120 : vector<8x384xbf16> to vector<8x384xf32>
    %125 = vector.extract_strided_slice %124 {offsets = [0, 0], sizes = [8, 128], strides = [1, 1]} : vector<8x384xf32> to vector<8x128xf32>
    %126 = vector.extract_strided_slice %123 {offsets = [0, 0], sizes = [8, 128], strides = [1, 1]} : vector<8x384xf32> to vector<8x128xf32>
    %127 = arith.addf %125, %126 : vector<8x128xf32>
    %128 = arith.negf %127 : vector<8x128xf32>
    %129 = math.exp %128 : vector<8x128xf32>
    %cst_34 = arith.constant 1.000000e+00 : f32
    %130 = vector.broadcast %cst_34 : f32 to vector<8x128xf32>
    %131 = arith.addf %130, %129 : vector<8x128xf32>
    %132 = arith.divf %130, %131 : vector<8x128xf32>
    %133 = vector.extract_strided_slice %124 {offsets = [0, 128], sizes = [8, 128], strides = [1, 1]} : vector<8x384xf32> to vector<8x128xf32>
    %134 = vector.extract_strided_slice %123 {offsets = [0, 128], sizes = [8, 128], strides = [1, 1]} : vector<8x384xf32> to vector<8x128xf32>
    %135 = arith.addf %133, %134 : vector<8x128xf32>
    %136 = arith.negf %135 : vector<8x128xf32>
    %137 = math.exp %136 : vector<8x128xf32>
    %cst_35 = arith.constant 1.000000e+00 : f32
    %138 = vector.broadcast %cst_35 : f32 to vector<8x128xf32>
    %139 = arith.addf %138, %137 : vector<8x128xf32>
    %140 = arith.divf %138, %139 : vector<8x128xf32>
    %141 = vector.extract_strided_slice %124 {offsets = [0, 256], sizes = [8, 128], strides = [1, 1]} : vector<8x384xf32> to vector<8x128xf32>
    %142 = vector.extract_strided_slice %123 {offsets = [0, 256], sizes = [8, 128], strides = [1, 1]} : vector<8x384xf32> to vector<8x128xf32>
    %143 = arith.mulf %132, %142 : vector<8x128xf32>
    %144 = arith.addf %141, %143 : vector<8x128xf32>
    %145 = math.tanh %144 : vector<8x128xf32>
    %cst_36 = arith.constant 1.000000e+00 : f32
    %146 = vector.broadcast %cst_36 : f32 to vector<8x128xf32>
    %147 = arith.subf %146, %140 : vector<8x128xf32>
    %148 = arith.mulf %147, %145 : vector<8x128xf32>
    %149 = arith.mulf %140, %119 : vector<8x128xf32>
    %150 = arith.addf %148, %149 : vector<8x128xf32>
    %c3_i32 = arith.constant 3 : i32
    %151 = vector.broadcast %c3_i32 : i32 to vector<8x128xi32>
    %152 = arith.cmpi sgt, %16, %151 : vector<8x128xi32>
    %153 = arith.select %152, %150, %119 : vector<8x128xi1>, vector<8x128xf32>
    %c32 = arith.constant 32 : index
    %c0_37 = arith.constant 0 : index
    %154 = vector.load %arg8[%c32, %c0_37] : memref<64x384xbf16, #tpu.memory_space<vmem>>, vector<8x384xbf16>
    %155 = arith.truncf %153 : vector<8x128xf32> to vector<8x128xbf16>
    %cst_38 = arith.constant dense<0.000000e+00> : vector<8x384xf32>
    %156 = tpu.matmul %155, %9, %cst_38 {dimension_numbers = #tpu.dot_dimension_numbers<[1], [0], [0], [1], [0, 0, 1, 1], [], []>} : vector<8x128xbf16>, vector<128x384xbf16>, vector<8x384xf32> -> vector<8x384xf32>
    %157 = arith.addf %156, %12 : vector<8x384xf32>
    %158 = arith.extf %154 : vector<8x384xbf16> to vector<8x384xf32>
    %159 = vector.extract_strided_slice %158 {offsets = [0, 0], sizes = [8, 128], strides = [1, 1]} : vector<8x384xf32> to vector<8x128xf32>
    %160 = vector.extract_strided_slice %157 {offsets = [0, 0], sizes = [8, 128], strides = [1, 1]} : vector<8x384xf32> to vector<8x128xf32>
    %161 = arith.addf %159, %160 : vector<8x128xf32>
    %162 = arith.negf %161 : vector<8x128xf32>
    %163 = math.exp %162 : vector<8x128xf32>
    %cst_39 = arith.constant 1.000000e+00 : f32
    %164 = vector.broadcast %cst_39 : f32 to vector<8x128xf32>
    %165 = arith.addf %164, %163 : vector<8x128xf32>
    %166 = arith.divf %164, %165 : vector<8x128xf32>
    %167 = vector.extract_strided_slice %158 {offsets = [0, 128], sizes = [8, 128], strides = [1, 1]} : vector<8x384xf32> to vector<8x128xf32>
    %168 = vector.extract_strided_slice %157 {offsets = [0, 128], sizes = [8, 128], strides = [1, 1]} : vector<8x384xf32> to vector<8x128xf32>
    %169 = arith.addf %167, %168 : vector<8x128xf32>
    %170 = arith.negf %169 : vector<8x128xf32>
    %171 = math.exp %170 : vector<8x128xf32>
    %cst_40 = arith.constant 1.000000e+00 : f32
    %172 = vector.broadcast %cst_40 : f32 to vector<8x128xf32>
    %173 = arith.addf %172, %171 : vector<8x128xf32>
    %174 = arith.divf %172, %173 : vector<8x128xf32>
    %175 = vector.extract_strided_slice %158 {offsets = [0, 256], sizes = [8, 128], strides = [1, 1]} : vector<8x384xf32> to vector<8x128xf32>
    %176 = vector.extract_strided_slice %157 {offsets = [0, 256], sizes = [8, 128], strides = [1, 1]} : vector<8x384xf32> to vector<8x128xf32>
    %177 = arith.mulf %166, %176 : vector<8x128xf32>
    %178 = arith.addf %175, %177 : vector<8x128xf32>
    %179 = math.tanh %178 : vector<8x128xf32>
    %cst_41 = arith.constant 1.000000e+00 : f32
    %180 = vector.broadcast %cst_41 : f32 to vector<8x128xf32>
    %181 = arith.subf %180, %174 : vector<8x128xf32>
    %182 = arith.mulf %181, %179 : vector<8x128xf32>
    %183 = arith.mulf %174, %153 : vector<8x128xf32>
    %184 = arith.addf %182, %183 : vector<8x128xf32>
    %c4_i32 = arith.constant 4 : i32
    %185 = vector.broadcast %c4_i32 : i32 to vector<8x128xi32>
    %186 = arith.cmpi sgt, %16, %185 : vector<8x128xi32>
    %187 = arith.select %186, %184, %153 : vector<8x128xi1>, vector<8x128xf32>
    %c40 = arith.constant 40 : index
    %c0_42 = arith.constant 0 : index
    %188 = vector.load %arg8[%c40, %c0_42] : memref<64x384xbf16, #tpu.memory_space<vmem>>, vector<8x384xbf16>
    %189 = arith.truncf %187 : vector<8x128xf32> to vector<8x128xbf16>
    %cst_43 = arith.constant dense<0.000000e+00> : vector<8x384xf32>
    %190 = tpu.matmul %189, %9, %cst_43 {dimension_numbers = #tpu.dot_dimension_numbers<[1], [0], [0], [1], [0, 0, 1, 1], [], []>} : vector<8x128xbf16>, vector<128x384xbf16>, vector<8x384xf32> -> vector<8x384xf32>
    %191 = arith.addf %190, %12 : vector<8x384xf32>
    %192 = arith.extf %188 : vector<8x384xbf16> to vector<8x384xf32>
    %193 = vector.extract_strided_slice %192 {offsets = [0, 0], sizes = [8, 128], strides = [1, 1]} : vector<8x384xf32> to vector<8x128xf32>
    %194 = vector.extract_strided_slice %191 {offsets = [0, 0], sizes = [8, 128], strides = [1, 1]} : vector<8x384xf32> to vector<8x128xf32>
    %195 = arith.addf %193, %194 : vector<8x128xf32>
    %196 = arith.negf %195 : vector<8x128xf32>
    %197 = math.exp %196 : vector<8x128xf32>
    %cst_44 = arith.constant 1.000000e+00 : f32
    %198 = vector.broadcast %cst_44 : f32 to vector<8x128xf32>
    %199 = arith.addf %198, %197 : vector<8x128xf32>
    %200 = arith.divf %198, %199 : vector<8x128xf32>
    %201 = vector.extract_strided_slice %192 {offsets = [0, 128], sizes = [8, 128], strides = [1, 1]} : vector<8x384xf32> to vector<8x128xf32>
    %202 = vector.extract_strided_slice %191 {offsets = [0, 128], sizes = [8, 128], strides = [1, 1]} : vector<8x384xf32> to vector<8x128xf32>
    %203 = arith.addf %201, %202 : vector<8x128xf32>
    %204 = arith.negf %203 : vector<8x128xf32>
    %205 = math.exp %204 : vector<8x128xf32>
    %cst_45 = arith.constant 1.000000e+00 : f32
    %206 = vector.broadcast %cst_45 : f32 to vector<8x128xf32>
    %207 = arith.addf %206, %205 : vector<8x128xf32>
    %208 = arith.divf %206, %207 : vector<8x128xf32>
    %209 = vector.extract_strided_slice %192 {offsets = [0, 256], sizes = [8, 128], strides = [1, 1]} : vector<8x384xf32> to vector<8x128xf32>
    %210 = vector.extract_strided_slice %191 {offsets = [0, 256], sizes = [8, 128], strides = [1, 1]} : vector<8x384xf32> to vector<8x128xf32>
    %211 = arith.mulf %200, %210 : vector<8x128xf32>
    %212 = arith.addf %209, %211 : vector<8x128xf32>
    %213 = math.tanh %212 : vector<8x128xf32>
    %cst_46 = arith.constant 1.000000e+00 : f32
    %214 = vector.broadcast %cst_46 : f32 to vector<8x128xf32>
    %215 = arith.subf %214, %208 : vector<8x128xf32>
    %216 = arith.mulf %215, %213 : vector<8x128xf32>
    %217 = arith.mulf %208, %187 : vector<8x128xf32>
    %218 = arith.addf %216, %217 : vector<8x128xf32>
    %c5_i32 = arith.constant 5 : i32
    %219 = vector.broadcast %c5_i32 : i32 to vector<8x128xi32>
    %220 = arith.cmpi sgt, %16, %219 : vector<8x128xi32>
    %221 = arith.select %220, %218, %187 : vector<8x128xi1>, vector<8x128xf32>
    %c48 = arith.constant 48 : index
    %c0_47 = arith.constant 0 : index
    %222 = vector.load %arg8[%c48, %c0_47] : memref<64x384xbf16, #tpu.memory_space<vmem>>, vector<8x384xbf16>
    %223 = arith.truncf %221 : vector<8x128xf32> to vector<8x128xbf16>
    %cst_48 = arith.constant dense<0.000000e+00> : vector<8x384xf32>
    %224 = tpu.matmul %223, %9, %cst_48 {dimension_numbers = #tpu.dot_dimension_numbers<[1], [0], [0], [1], [0, 0, 1, 1], [], []>} : vector<8x128xbf16>, vector<128x384xbf16>, vector<8x384xf32> -> vector<8x384xf32>
    %225 = arith.addf %224, %12 : vector<8x384xf32>
    %226 = arith.extf %222 : vector<8x384xbf16> to vector<8x384xf32>
    %227 = vector.extract_strided_slice %226 {offsets = [0, 0], sizes = [8, 128], strides = [1, 1]} : vector<8x384xf32> to vector<8x128xf32>
    %228 = vector.extract_strided_slice %225 {offsets = [0, 0], sizes = [8, 128], strides = [1, 1]} : vector<8x384xf32> to vector<8x128xf32>
    %229 = arith.addf %227, %228 : vector<8x128xf32>
    %230 = arith.negf %229 : vector<8x128xf32>
    %231 = math.exp %230 : vector<8x128xf32>
    %cst_49 = arith.constant 1.000000e+00 : f32
    %232 = vector.broadcast %cst_49 : f32 to vector<8x128xf32>
    %233 = arith.addf %232, %231 : vector<8x128xf32>
    %234 = arith.divf %232, %233 : vector<8x128xf32>
    %235 = vector.extract_strided_slice %226 {offsets = [0, 128], sizes = [8, 128], strides = [1, 1]} : vector<8x384xf32> to vector<8x128xf32>
    %236 = vector.extract_strided_slice %225 {offsets = [0, 128], sizes = [8, 128], strides = [1, 1]} : vector<8x384xf32> to vector<8x128xf32>
    %237 = arith.addf %235, %236 : vector<8x128xf32>
    %238 = arith.negf %237 : vector<8x128xf32>
    %239 = math.exp %238 : vector<8x128xf32>
    %cst_50 = arith.constant 1.000000e+00 : f32
    %240 = vector.broadcast %cst_50 : f32 to vector<8x128xf32>
    %241 = arith.addf %240, %239 : vector<8x128xf32>
    %242 = arith.divf %240, %241 : vector<8x128xf32>
    %243 = vector.extract_strided_slice %226 {offsets = [0, 256], sizes = [8, 128], strides = [1, 1]} : vector<8x384xf32> to vector<8x128xf32>
    %244 = vector.extract_strided_slice %225 {offsets = [0, 256], sizes = [8, 128], strides = [1, 1]} : vector<8x384xf32> to vector<8x128xf32>
    %245 = arith.mulf %234, %244 : vector<8x128xf32>
    %246 = arith.addf %243, %245 : vector<8x128xf32>
    %247 = math.tanh %246 : vector<8x128xf32>
    %cst_51 = arith.constant 1.000000e+00 : f32
    %248 = vector.broadcast %cst_51 : f32 to vector<8x128xf32>
    %249 = arith.subf %248, %242 : vector<8x128xf32>
    %250 = arith.mulf %249, %247 : vector<8x128xf32>
    %251 = arith.mulf %242, %221 : vector<8x128xf32>
    %252 = arith.addf %250, %251 : vector<8x128xf32>
    %c6_i32 = arith.constant 6 : i32
    %253 = vector.broadcast %c6_i32 : i32 to vector<8x128xi32>
    %254 = arith.cmpi sgt, %16, %253 : vector<8x128xi32>
    %255 = arith.select %254, %252, %221 : vector<8x128xi1>, vector<8x128xf32>
    %c56 = arith.constant 56 : index
    %c0_52 = arith.constant 0 : index
    %256 = vector.load %arg8[%c56, %c0_52] : memref<64x384xbf16, #tpu.memory_space<vmem>>, vector<8x384xbf16>
    %257 = arith.truncf %255 : vector<8x128xf32> to vector<8x128xbf16>
    %cst_53 = arith.constant dense<0.000000e+00> : vector<8x384xf32>
    %258 = tpu.matmul %257, %9, %cst_53 {dimension_numbers = #tpu.dot_dimension_numbers<[1], [0], [0], [1], [0, 0, 1, 1], [], []>} : vector<8x128xbf16>, vector<128x384xbf16>, vector<8x384xf32> -> vector<8x384xf32>
    %259 = arith.addf %258, %12 : vector<8x384xf32>
    %260 = arith.extf %256 : vector<8x384xbf16> to vector<8x384xf32>
    %261 = vector.extract_strided_slice %260 {offsets = [0, 0], sizes = [8, 128], strides = [1, 1]} : vector<8x384xf32> to vector<8x128xf32>
    %262 = vector.extract_strided_slice %259 {offsets = [0, 0], sizes = [8, 128], strides = [1, 1]} : vector<8x384xf32> to vector<8x128xf32>
    %263 = arith.addf %261, %262 : vector<8x128xf32>
    %264 = arith.negf %263 : vector<8x128xf32>
    %265 = math.exp %264 : vector<8x128xf32>
    %cst_54 = arith.constant 1.000000e+00 : f32
    %266 = vector.broadcast %cst_54 : f32 to vector<8x128xf32>
    %267 = arith.addf %266, %265 : vector<8x128xf32>
    %268 = arith.divf %266, %267 : vector<8x128xf32>
    %269 = vector.extract_strided_slice %260 {offsets = [0, 128], sizes = [8, 128], strides = [1, 1]} : vector<8x384xf32> to vector<8x128xf32>
    %270 = vector.extract_strided_slice %259 {offsets = [0, 128], sizes = [8, 128], strides = [1, 1]} : vector<8x384xf32> to vector<8x128xf32>
    %271 = arith.addf %269, %270 : vector<8x128xf32>
    %272 = arith.negf %271 : vector<8x128xf32>
    %273 = math.exp %272 : vector<8x128xf32>
    %cst_55 = arith.constant 1.000000e+00 : f32
    %274 = vector.broadcast %cst_55 : f32 to vector<8x128xf32>
    %275 = arith.addf %274, %273 : vector<8x128xf32>
    %276 = arith.divf %274, %275 : vector<8x128xf32>
    %277 = vector.extract_strided_slice %260 {offsets = [0, 256], sizes = [8, 128], strides = [1, 1]} : vector<8x384xf32> to vector<8x128xf32>
    %278 = vector.extract_strided_slice %259 {offsets = [0, 256], sizes = [8, 128], strides = [1, 1]} : vector<8x384xf32> to vector<8x128xf32>
    %279 = arith.mulf %268, %278 : vector<8x128xf32>
    %280 = arith.addf %277, %279 : vector<8x128xf32>
    %281 = math.tanh %280 : vector<8x128xf32>
    %cst_56 = arith.constant 1.000000e+00 : f32
    %282 = vector.broadcast %cst_56 : f32 to vector<8x128xf32>
    %283 = arith.subf %282, %276 : vector<8x128xf32>
    %284 = arith.mulf %283, %281 : vector<8x128xf32>
    %285 = arith.mulf %276, %255 : vector<8x128xf32>
    %286 = arith.addf %284, %285 : vector<8x128xf32>
    %c7_i32 = arith.constant 7 : i32
    %287 = vector.broadcast %c7_i32 : i32 to vector<8x128xi32>
    %288 = arith.cmpi sgt, %16, %287 : vector<8x128xi32>
    %289 = arith.select %288, %286, %255 : vector<8x128xi1>, vector<8x128xf32>
    %c0_57 = arith.constant 0 : index
    %c0_58 = arith.constant 0 : index
    %c0_59 = arith.constant 0 : index
    %290 = vector.load %arg7[%c0_57, %c0_58, %c0_59] : memref<1x8x128xf32, #tpu.memory_space<vmem>>, vector<1x8x128xf32>
    %291 = vector.shape_cast %290 : vector<1x8x128xf32> to vector<8x128xf32>
    %292 = vector.shape_cast %289 : vector<8x128xf32> to vector<1x8x128xf32>
    tpu.vector_store %arg7[%c0_57, %c0_58, %c0_59], %292 {strides = array<i32>} : memref<1x8x128xf32, #tpu.memory_space<vmem>>, vector<1x8x128xf32>,
    return
  }
  func.func @transform_0(%arg0: i32) -> (i32, i32, i32) {
    %c0_i32 = arith.constant 0 : i32
    %c0_i32_0 = arith.constant 0 : i32
    %c0_i32_1 = arith.constant 0 : i32
    return %arg0, %c0_i32, %c0_i32_0 : i32, i32, i32
  }
  func.func @transform_1(%arg0: i32) -> (i32, i32, i32) {
    %c0_i32 = arith.constant 0 : i32
    %c0_i32_0 = arith.constant 0 : i32
    %c0_i32_1 = arith.constant 0 : i32
    return %arg0, %c0_i32, %c0_i32_0 : i32, i32, i32
  }
  func.func @transform_2(%arg0: i32) -> (i32, i32) {
    %c0_i32 = arith.constant 0 : i32
    %c0_i32_0 = arith.constant 0 : i32
    %c0_i32_1 = arith.constant 0 : i32
    return %c0_i32, %c0_i32_0 : i32, i32
  }
  func.func @transform_3(%arg0: i32) -> (i32, i32) {
    %c0_i32 = arith.constant 0 : i32
    %c0_i32_0 = arith.constant 0 : i32
    %c0_i32_1 = arith.constant 0 : i32
    return %c0_i32, %c0_i32_0 : i32, i32
  }
  func.func @transform_4(%arg0: i32) -> (i32, i32) {
    %c0_i32 = arith.constant 0 : i32
    %c0_i32_0 = arith.constant 0 : i32
    %c0_i32_1 = arith.constant 0 : i32
    return %c0_i32, %c0_i32_0 : i32, i32
  }
  func.func @transform_5(%arg0: i32) -> (i32, i32) {
    %c0_i32 = arith.constant 0 : i32
    %c0_i32_0 = arith.constant 0 : i32
    %c0_i32_1 = arith.constant 0 : i32
    return %c0_i32, %c0_i32_0 : i32, i32
  }
  func.func @transform_6(%arg0: i32) -> (i32, i32, i32) {
    %c0_i32 = arith.constant 0 : i32
    %c0_i32_0 = arith.constant 0 : i32
    %c0_i32_1 = arith.constant 0 : i32
    return %arg0, %c0_i32, %c0_i32_0 : i32, i32, i32
  }
}

</mosaic_0001>

<llo_original>
// kernel: tpu_custom_call.1
$region0: #{tpu_custom_call.1}
  #allocation0 [shape = 'u32[]', space=smem, size = 0x4, offset = 0x4, fixed_abs, tag = 'smem constant byte address 0x4 - core index']
  #allocation1 [shape = 'u32[144,128]{1,0:T(1,128)}', space=vmem, size = 0x12000, scoped, tag = 'internal scratch']
  #allocation2 [shape = 'bf16[64,384]{1,0:T(8,128)(2,1)}', space=vmem, size = 0xc000, scoped, tag = 'scratch operand']
  %s0 = inlined_call_operand.hbm [shape: bf16[1,64,128], index: 0, kind: input, shape index: {}]
  %s1 = inlined_call_operand.vmem [shape: s32[1,8,1], index: 1, kind: input, shape index: {}]
  %s2 = inlined_call_operand.hbm [shape: bf16[128,384], index: 2, kind: input, shape index: {}]
  %s3 = inlined_call_operand.hbm [shape: bf16[128,384], index: 3, kind: input, shape index: {}]
  %s4 = inlined_call_operand.vmem [shape: f32[1,384], index: 4, kind: input, shape index: {}]
  %s5 = inlined_call_operand.vmem [shape: f32[1,384], index: 5, kind: input, shape index: {}]
  %s6 = inlined_call_operand.hbm [shape: f32[1,8,128], index: 6, kind: output, shape index: {}]
  %s7 = sld [smem:[#allocation0]]
  $region46: #{tpu_custom_call.1} parent=0
    _
  %s9 = ssub.s32 1, %s7
  %s10 = scalar_select 0, %s9, %s7
  $region1: #{tpu_custom_call.1} parent=0
    #allocation3 [shape = 'u8[16384]{0}', space=vmem, size = 0x4000, scoped, tag = 'input window, operand 0, single buffered']
    #allocation4 [shape = 's32[1]{0}', space=sflag, size = 0x4, scoped, tag = 'scoped memory for tpu_custom_call.1']
    #allocation5 [shape = 's32[1]{0}', space=sflag, size = 0x4, scoped, tag = 'scoped memory for tpu_custom_call.1']
    #allocation6 [shape = 'u8[98304]{0}', space=vmem, size = 0x18000, scoped, tag = 'input window, operand 2, single buffered']
    #allocation7 [shape = 's32[1]{0}', space=sflag, size = 0x4, scoped, tag = 'scoped memory for tpu_custom_call.1']
    #allocation8 [shape = 'u8[98304]{0}', space=vmem, size = 0x18000, scoped, tag = 'input window, operand 3, single buffered']
    #allocation9 [shape = 'u8[4096]{0}', space=vmem, size = 0x1000, scoped, tag = 'output window, operand 0, single buffered']
    %11 = vsyncpa [#allocation4], 0
    %12 = vsyncpa [#allocation7], 0
    %13 = vsyncpa [#allocation5], 0
    // Predicated region
    $region2: #{tpu_custom_call.1} parent=1 // pred_check
      _
    $region3: #{tpu_custom_call.1} parent=1 // pred_check_branch
      %15 = sbr.rel (0) target = $region5
    $region4: #{tpu_custom_call.1} parent=1 // pred_region
      %s17 = ssub.s32 512, 512
      %18 = vsyncadd [#allocation4], %s17
      %s19 = sshll.u32 [#allocation3], 4
      %s20 = int_to_ptr.vmem [resolvable:$true] %s19
      %25 = dma.hbm_to_vmem [thread:$0]  %s0, 512, %s20, [#allocation4], 64, 64, 4
    $region5: #{tpu_custom_call.1} parent=1 // pred_fallthru
      _
    // Predicated region
    $region6: #{tpu_custom_call.1} parent=1 // pred_check
      _
    $region7: #{tpu_custom_call.1} parent=1 // pred_check_branch
      %27 = sbr.rel (0) target = $region9
    $region8: #{tpu_custom_call.1} parent=1 // pred_region
      _
    $region9: #{tpu_custom_call.1} parent=1 // pred_fallthru
      _
    // Predicated region
    $region10: #{tpu_custom_call.1} parent=1 // pred_check
      _
    $region11: #{tpu_custom_call.1} parent=1 // pred_check_branch
      %29 = sbr.rel (0) target = $region13
    $region12: #{tpu_custom_call.1} parent=1 // pred_region
      %s31 = ssub.s32 3072, 3072
      %32 = vsyncadd [#allocation7], %s31
      %s33 = sshll.u32 [#allocation6], 4
      %s34 = int_to_ptr.vmem [resolvable:$true] %s33
      %39 = dma.hbm_to_vmem [thread:$0]  %s2, 3072, %s34, [#allocation7], 192, 192, 12
    $region13: #{tpu_custom_call.1} parent=1 // pred_fallthru
      _
    // Predicated region
    $region14: #{tpu_custom_call.1} parent=1 // pred_check
      _
    $region15: #{tpu_custom_call.1} parent=1 // pred_check_branch
      %41 = sbr.rel (0) target = $region17
    $region16: #{tpu_custom_call.1} parent=1 // pred_region
      %s43 = ssub.s32 3072, 3072
      %44 = vsyncadd [#allocation7], %s43
      %s45 = sshll.u32 [#allocation8], 4
      %s46 = int_to_ptr.vmem [resolvable:$true] %s45
      %51 = dma.hbm_to_vmem [thread:$0]  %s3, 3072, %s46, [#allocation7], 192, 192, 12
    $region17: #{tpu_custom_call.1} parent=1 // pred_fallthru
      _
    // Predicated region
    $region18: #{tpu_custom_call.1} parent=1 // pred_check
      _
    $region19: #{tpu_custom_call.1} parent=1 // pred_check_branch
      %53 = sbr.rel (0) target = $region21
    $region20: #{tpu_custom_call.1} parent=1 // pred_region
      _
    $region21: #{tpu_custom_call.1} parent=1 // pred_fallthru
      _
    // Predicated region
    $region22: #{tpu_custom_call.1} parent=1 // pred_check
      _
    $region23: #{tpu_custom_call.1} parent=1 // pred_check_branch
      %55 = sbr.rel (0) target = $region25
    $region24: #{tpu_custom_call.1} parent=1 // pred_region
      _
    $region25: #{tpu_custom_call.1} parent=1 // pred_fallthru
      _
    // Predicated region
    $region26: #{tpu_custom_call.1} parent=1 // pred_check
      _
    $region27: #{tpu_custom_call.1} parent=1 // pred_check_branch
      %57 = sbr.rel (0) target = $region29
    $region28: #{tpu_custom_call.1} parent=1 // pred_region
      %58 = dma.done [#allocation4], 512
    $region29: #{tpu_custom_call.1} parent=1 // pred_fallthru
      _
    // Predicated region
    $region30: #{tpu_custom_call.1} parent=1 // pred_check
      _
    $region31: #{tpu_custom_call.1} parent=1 // pred_check_branch
      %60 = sbr.rel (0) target = $region33
    $region32: #{tpu_custom_call.1} parent=1 // pred_region
      %61 = dma.done [#allocation7], 3072
    $region33: #{tpu_custom_call.1} parent=1 // pred_fallthru
      _
    // Predicated region
    $region34: #{tpu_custom_call.1} parent=1 // pred_check
      _
    $region35: #{tpu_custom_call.1} parent=1 // pred_check_branch
      %63 = sbr.rel (0) target = $region37
    $region36: #{tpu_custom_call.1} parent=1 // pred_region
      %64 = dma.done [#allocation7], 3072
    $region37: #{tpu_custom_call.1} parent=1 // pred_fallthru
      _
    %v66 = vld [vmem:[#allocation3] sm:$0xf]
    %v67 = vld [vmem:[#allocation3 + $0x4] sm:$0xf]
    %v68 = vld [vmem:[#allocation3 + $0x8] sm:$0xf]
    %v69 = vld [vmem:[#allocation3 + $0xc] sm:$0xf]
    %v70 = vld [vmem:[#allocation3 + $0x10] sm:$0xf]
    %v71 = vld [vmem:[#allocation3 + $0x14] sm:$0xf]
    %v72 = vld [vmem:[#allocation3 + $0x18] sm:$0xf]
    %v73 = vld [vmem:[#allocation3 + $0x1c] sm:$0xf]
    %v74 = vld [vmem:[#allocation6] sm:$0xff]
    %v75 = vld [vmem:[#allocation6 + $0x8] sm:$0xf]
    %v76 = vld [vmem:[#allocation6 + $0xc] sm:$0xff]
    %v77 = vld [vmem:[#allocation6 + $0x14] sm:$0xf]
    %v78 = vld [vmem:[#allocation6 + $0x18] sm:$0xff]
    %v79 = vld [vmem:[#allocation6 + $0x20] sm:$0xf]
    %v80 = vld [vmem:[#allocation6 + $0x24] sm:$0xff]
    %v81 = vld [vmem:[#allocation6 + $0x2c] sm:$0xf]
    %v82 = vld [vmem:[#allocation6 + $0x30] sm:$0xff]
    %v83 = vld [vmem:[#allocation6 + $0x38] sm:$0xf]
    %v84 = vld [vmem:[#allocation6 + $0x3c] sm:$0xff]
    %v85 = vld [vmem:[#allocation6 + $0x44] sm:$0xf]
    %v86 = vld [vmem:[#allocation6 + $0x48] sm:$0xff]
    %v87 = vld [vmem:[#allocation6 + $0x50] sm:$0xf]
    %v88 = vld [vmem:[#allocation6 + $0x54] sm:$0xff]
    %v89 = vld [vmem:[#allocation6 + $0x5c] sm:$0xf]
    %v90 = vld [vmem:[#allocation6 + $0x60] sm:$0xff]
    %v91 = vld [vmem:[#allocation6 + $0x68] sm:$0xf]
    %v92 = vld [vmem:[#allocation6 + $0x6c] sm:$0xff]
    %v93 = vld [vmem:[#allocation6 + $0x74] sm:$0xf]
    %v94 = vld [vmem:[#allocation6 + $0x78] sm:$0xff]
    %v95 = vld [vmem:[#allocation6 + $0x80] sm:$0xf]
    %v96 = vld [vmem:[#allocation6 + $0x84] sm:$0xff]
    %v97 = vld [vmem:[#allocation6 + $0x8c] sm:$0xf]
    %v98 = vld [vmem:[#allocation6 + $0x90] sm:$0xff]
    %v99 = vld [vmem:[#allocation6 + $0x98] sm:$0xf]
    %v100 = vld [vmem:[#allocation6 + $0x9c] sm:$0xff]
    %v101 = vld [vmem:[#allocation6 + $0xa4] sm:$0xf]
    %v102 = vld [vmem:[#allocation6 + $0xa8] sm:$0xff]
    %v103 = vld [vmem:[#allocation6 + $0xb0] sm:$0xf]
    %v104 = vld [vmem:[#allocation6 + $0xb4] sm:$0xff]
    %v105 = vld [vmem:[#allocation6 + $0xbc] sm:$0xf]
    %v106 = vld [vmem:[%s4] sm:$0x7]
    %v108 = vlaneseq
    %v109 = vshrl.u32 %v108, 7
    %v110 = vsub.s32 0, %v109
    %v111 = vrot.slane %v106, %v110
    %v112 = vlaneseq
    %v113 = vshrl.u32 %v112, 7
    %v114 = vsub.s32 1, %v113
    %v115 = vrot.slane %v106, %v114
    %v116 = vlaneseq
    %v117 = vshrl.u32 %v116, 7
    %v118 = vsub.s32 2, %v117
    %v119 = vrot.slane %v106, %v118
    %v131 = vunpack.c.l.b16 %v66
    %v132 = vunpack.c.l.b16 %v67
    %v133 = vunpack.c.l.b16 %v68
    %v134 = vunpack.c.l.b16 %v69
    %v135 = vunpack.c.l.b16 %v70
    %v136 = vunpack.c.l.b16 %v71
    %v137 = vunpack.c.l.b16 %v72
    %v138 = vunpack.c.l.b16 %v73
    %v139 = vpack.c.b16 %v132, %v131
    %v140 = vpack.c.b16 %v134, %v133
    %v141 = vpack.c.b16 %v136, %v135
    %v142 = vpack.c.b16 %v138, %v137
    %v179 = vunpack.c.l.b16 %v74
    %v180 = vunpack.c.h.b16 %v74
    %v181 = vunpack.c.l.b16 %v75
    %v182 = vunpack.c.l.b16 %v76
    %v183 = vunpack.c.h.b16 %v76
    %v184 = vunpack.c.l.b16 %v77
    %v185 = vunpack.c.l.b16 %v78
    %v186 = vunpack.c.h.b16 %v78
    %v187 = vunpack.c.l.b16 %v79
    %v188 = vunpack.c.l.b16 %v80
    %v189 = vunpack.c.h.b16 %v80
    %v190 = vunpack.c.l.b16 %v81
    %v191 = vunpack.c.l.b16 %v82
    %v192 = vunpack.c.h.b16 %v82
    %v193 = vunpack.c.l.b16 %v83
    %v194 = vunpack.c.l.b16 %v84
    %v195 = vunpack.c.h.b16 %v84
    %v196 = vunpack.c.l.b16 %v85
    %v197 = vunpack.c.l.b16 %v86
    %v198 = vunpack.c.h.b16 %v86
    %v199 = vunpack.c.l.b16 %v87
    %v200 = vunpack.c.l.b16 %v88
    %v201 = vunpack.c.h.b16 %v88
    %v202 = vunpack.c.l.b16 %v89
    %v203 = vunpack.c.l.b16 %v90
    %v204 = vunpack.c.h.b16 %v90
    %v205 = vunpack.c.l.b16 %v91
    %v206 = vunpack.c.l.b16 %v92
    %v207 = vunpack.c.h.b16 %v92
    %v208 = vunpack.c.l.b16 %v93
    %v209 = vunpack.c.l.b16 %v94
    %v210 = vunpack.c.h.b16 %v94
    %v211 = vunpack.c.l.b16 %v95
    %v212 = vunpack.c.l.b16 %v96
    %v213 = vunpack.c.h.b16 %v96
    %v214 = vunpack.c.l.b16 %v97
    %v215 = vunpack.c.l.b16 %v98
    %v216 = vunpack.c.h.b16 %v98
    %v217 = vunpack.c.l.b16 %v99
    %v218 = vunpack.c.l.b16 %v100
    %v219 = vunpack.c.h.b16 %v100
    %v220 = vunpack.c.l.b16 %v101
    %v221 = vunpack.c.l.b16 %v102
    %v222 = vunpack.c.h.b16 %v102
    %v223 = vunpack.c.l.b16 %v103
    %v224 = vunpack.c.l.b16 %v104
    %v225 = vunpack.c.h.b16 %v104
    %v226 = vunpack.c.l.b16 %v105
    %v227 = vpack.c.b16 %v182, %v179
    %v228 = vpack.c.b16 %v183, %v180
    %v229 = vpack.c.b16 %v184, %v181
    %v230 = vpack.c.b16 %v188, %v185
    %v231 = vpack.c.b16 %v189, %v186
    %v232 = vpack.c.b16 %v190, %v187
    %v233 = vpack.c.b16 %v194, %v191
    %v234 = vpack.c.b16 %v195, %v192
    %v235 = vpack.c.b16 %v196, %v193
    %v236 = vpack.c.b16 %v200, %v197
    %v237 = vpack.c.b16 %v201, %v198
    %v238 = vpack.c.b16 %v202, %v199
    %v239 = vpack.c.b16 %v206, %v203
    %v240 = vpack.c.b16 %v207, %v204
    %v241 = vpack.c.b16 %v208, %v205
    %v242 = vpack.c.b16 %v212, %v209
    %v243 = vpack.c.b16 %v213, %v210
    %v244 = vpack.c.b16 %v214, %v211
    %v245 = vpack.c.b16 %v218, %v215
    %v246 = vpack.c.b16 %v219, %v216
    %v247 = vpack.c.b16 %v220, %v217
    %v248 = vpack.c.b16 %v224, %v221
    %v249 = vpack.c.b16 %v225, %v222
    %v250 = vpack.c.b16 %v226, %v223
    %275 = vmatprep.subr.bf16.mxu0 %v249
    %276 = vmatpush1.bf16.msra.mxu0 %v248
    %277 = vmatprep.subr.bf16.mxu0 %v246
    %278 = vmatpush1.bf16.msra.mxu0 %v245
    %279 = vmatprep.subr.bf16.mxu0 %v243
    %280 = vmatpush1.bf16.msra.mxu0 %v242
    %281 = vmatprep.subr.bf16.mxu0 %v240
    %282 = vmatpush1.bf16.msra.mxu0 %v239
    %283 = vmatprep.subr.bf16.mxu0 %v237
    %284 = vmatpush1.bf16.msra.mxu0 %v236
    %285 = vmatprep.subr.bf16.mxu0 %v234
    %286 = vmatpush1.bf16.msra.mxu0 %v233
    %287 = vmatprep.subr.bf16.mxu0 %v231
    %288 = vmatpush1.bf16.msra.mxu0 %v230
    %289 = vmatprep.subr.bf16.mxu0 %v228
    %290 = vmatpush1.bf16.msra.mxu0 %v227
    %291 = vmatprep.subr.bf16.mxu0 0
    %292 = vmatpush2.bf16.msra.mxu0 0
    %293 = vmatprep.subr.bf16.mxu0 0
    %294 = vmatpush2.bf16.msra.mxu0 0
    %295 = vmatprep.subr.bf16.mxu0 0
    %296 = vmatpush2.bf16.msra.mxu0 0
    %297 = vmatprep.subr.bf16.mxu0 0
    %298 = vmatpush2.bf16.msra.mxu0 0
    %299 = vmatprep.subr.bf16.mxu0 0
    %300 = vmatpush2.bf16.msra.mxu0 0
    %301 = vmatprep.subr.bf16.mxu0 0
    %302 = vmatpush2.bf16.msra.mxu0 0
    %303 = vmatprep.subr.bf16.mxu0 0
    %304 = vmatpush2.bf16.msra.mxu0 0
    %305 = vmatprep.subr.bf16.mxu0 0
    %306 = vmatpush2.bf16.msra.mxu0 0
    %307 = vmatprep.mubr.bf16.mxu0 0
    %308 = vmatmul.mubr.bf16.gmra.mxu0 %v139
    %v309 = vpop.f32.mrf.mxu0
    %v310 = vadd.f32 %v111, %v309
    %v311 = vpop.f32.mrf.mxu0
    %v312 = vadd.f32 %v115, %v311
    %v313 = vpop.f32.mrf.mxu0
    %v314 = vadd.f32 %v111, %v313
    %v315 = vpop.f32.mrf.mxu0
    %v316 = vadd.f32 %v115, %v315
    %317 = vmatprep.mubr.bf16.mxu0 0
    %318 = vmatmul.mubr.bf16.gmra.mxu0 %v140
    %v319 = vpop.f32.mrf.mxu0
    %v320 = vadd.f32 %v111, %v319
    %v321 = vpop.f32.mrf.mxu0
    %v322 = vadd.f32 %v115, %v321
    %v323 = vpop.f32.mrf.mxu0
    %v324 = vadd.f32 %v111, %v323
    %v325 = vpop.f32.mrf.mxu0
    %v326 = vadd.f32 %v115, %v325
    %327 = vmatprep.mubr.bf16.mxu0 0
    %328 = vmatmul.mubr.bf16.gmra.mxu0 %v141
    %v329 = vpop.f32.mrf.mxu0
    %v330 = vadd.f32 %v111, %v329
    %v331 = vpop.f32.mrf.mxu0
    %v332 = vadd.f32 %v115, %v331
    %v333 = vpop.f32.mrf.mxu0
    %v334 = vadd.f32 %v111, %v333
    %v335 = vpop.f32.mrf.mxu0
    %v336 = vadd.f32 %v115, %v335
    %337 = vmatprep.mubr.bf16.mxu0 0
    %338 = vmatmul.mubr.bf16.gmra.mxu0 %v142
    %v339 = vpop.f32.mrf.mxu0
    %v340 = vadd.f32 %v111, %v339
    %v341 = vpop.f32.mrf.mxu0
    %v342 = vadd.f32 %v115, %v341
    %v343 = vpop.f32.mrf.mxu0
    %v344 = vadd.f32 %v111, %v343
    %v345 = vpop.f32.mrf.mxu0
    %v346 = vadd.f32 %v115, %v345
    %347 = vdwg.mxu0
    %348 = vmatprep.subr.bf16.mxu0 0
    %349 = vmatpush1.bf16.msra.mxu0 %v250
    %350 = vmatprep.subr.bf16.mxu0 0
    %351 = vmatpush1.bf16.msra.mxu0 %v247
    %352 = vmatprep.subr.bf16.mxu0 0
    %353 = vmatpush1.bf16.msra.mxu0 %v244
    %354 = vmatprep.subr.bf16.mxu0 0
    %355 = vmatpush1.bf16.msra.mxu0 %v241
    %356 = vmatprep.subr.bf16.mxu0 0
    %357 = vmatpush1.bf16.msra.mxu0 %v238
    %358 = vmatprep.subr.bf16.mxu0 0
    %359 = vmatpush1.bf16.msra.mxu0 %v235
    %360 = vmatprep.subr.bf16.mxu0 0
    %361 = vmatpush1.bf16.msra.mxu0 %v232
    %362 = vmatprep.subr.bf16.mxu0 0
    %363 = vmatpush1.bf16.msra.mxu0 %v229
    %364 = vmatprep.subr.bf16.mxu0 0
    %365 = vmatpush2.bf16.msra.mxu0 0
    %366 = vmatprep.subr.bf16.mxu0 0
    %367 = vmatpush2.bf16.msra.mxu0 0
    %368 = vmatprep.subr.bf16.mxu0 0
    %369 = vmatpush2.bf16.msra.mxu0 0
    %370 = vmatprep.subr.bf16.mxu0 0
    %371 = vmatpush2.bf16.msra.mxu0 0
    %372 = vmatprep.subr.bf16.mxu0 0
    %373 = vmatpush2.bf16.msra.mxu0 0
    %374 = vmatprep.subr.bf16.mxu0 0
    %375 = vmatpush2.bf16.msra.mxu0 0
    %376 = vmatprep.subr.bf16.mxu0 0
    %377 = vmatpush2.bf16.msra.mxu0 0
    %378 = vmatprep.subr.bf16.mxu0 0
    %379 = vmatpush2.bf16.msra.mxu0 0
    %380 = vmatprep.mubr.bf16.mxu0 0
    %381 = vmatmul.mubr.bf16.gmra.mxu0 %v139
    %v382 = vpop.f32.mrf.mxu0
    %v383 = vadd.f32 %v119, %v382
    %v384 = vpop.f32.mrf.mxu0
    %v385 = vpop.f32.mrf.mxu0
    %v386 = vadd.f32 %v119, %v385
    %v387 = vpop.f32.mrf.mxu0
    %388 = vmatprep.mubr.bf16.mxu0 0
    %389 = vmatmul.mubr.bf16.gmra.mxu0 %v140
    %v390 = vpop.f32.mrf.mxu0
    %v391 = vadd.f32 %v119, %v390
    %v392 = vpop.f32.mrf.mxu0
    %v393 = vpop.f32.mrf.mxu0
    %v394 = vadd.f32 %v119, %v393
    %v395 = vpop.f32.mrf.mxu0
    %396 = vmatprep.mubr.bf16.mxu0 0
    %397 = vmatmul.mubr.bf16.gmra.mxu0 %v141
    %v398 = vpop.f32.mrf.mxu0
    %v399 = vadd.f32 %v119, %v398
    %v400 = vpop.f32.mrf.mxu0
    %v401 = vpop.f32.mrf.mxu0
    %v402 = vadd.f32 %v119, %v401
    %v403 = vpop.f32.mrf.mxu0
    %404 = vmatprep.mubr.bf16.mxu0 0
    %405 = vmatmul.mubr.bf16.gmra.mxu0 %v142
    %v406 = vpop.f32.mrf.mxu0
    %v407 = vadd.f32 %v119, %v406
    %v408 = vpop.f32.mrf.mxu0
    %v409 = vpop.f32.mrf.mxu0
    %v410 = vadd.f32 %v119, %v409
    %v411 = vpop.f32.mrf.mxu0
    %412 = vdwg.mxu0
    %v413 = vpack.c.bf16 %v314, %v310
    %v414 = vpack.c.bf16 %v316, %v312
    %v415 = vpack.c.bf16 %v386, %v383
    %v416 = vpack.c.bf16 %v324, %v320
    %v417 = vpack.c.bf16 %v326, %v322
    %v418 = vpack.c.bf16 %v394, %v391
    %v419 = vpack.c.bf16 %v334, %v330
    %v420 = vpack.c.bf16 %v336, %v332
    %v421 = vpack.c.bf16 %v402, %v399
    %v422 = vpack.c.bf16 %v344, %v340
    %v423 = vpack.c.bf16 %v346, %v342
    %v424 = vpack.c.bf16 %v410, %v407
    %v437 = vunpack.c.l.b16 %v413
    %v438 = vunpack.c.l.b16 %v414
    %v439 = vunpack.c.l.b16 %v415
    %v440 = vunpack.c.h.b16 %v413
    %v441 = vunpack.c.h.b16 %v414
    %v442 = vunpack.c.h.b16 %v415
    %v443 = vunpack.c.l.b16 %v416
    %v444 = vunpack.c.l.b16 %v417
    %v445 = vunpack.c.l.b16 %v418
    %v446 = vunpack.c.h.b16 %v416
    %v447 = vunpack.c.h.b16 %v417
    %v448 = vunpack.c.h.b16 %v418
    %v449 = vunpack.c.l.b16 %v419
    %v450 = vunpack.c.l.b16 %v420
    %v451 = vunpack.c.l.b16 %v421
    %v452 = vunpack.c.h.b16 %v419
    %v453 = vunpack.c.h.b16 %v420
    %v454 = vunpack.c.h.b16 %v421
    %v455 = vunpack.c.l.b16 %v422
    %v456 = vunpack.c.l.b16 %v423
    %v457 = vunpack.c.l.b16 %v424
    %v458 = vunpack.c.h.b16 %v422
    %v459 = vunpack.c.h.b16 %v423
    %v460 = vunpack.c.h.b16 %v424
    %v461 = vpack.c.b16 %v438, %v437
    %v462 = vpack.c.b16 %v439, %v439
    %v463 = vpack.c.b16 %v441, %v440
    %v464 = vpack.c.b16 %v442, %v442
    %v465 = vpack.c.b16 %v444, %v443
    %v466 = vpack.c.b16 %v445, %v445
    %v467 = vpack.c.b16 %v447, %v446
    %v468 = vpack.c.b16 %v448, %v448
    %v469 = vpack.c.b16 %v450, %v449
    %v470 = vpack.c.b16 %v451, %v451
    %v471 = vpack.c.b16 %v453, %v452
    %v472 = vpack.c.b16 %v454, %v454
    %v473 = vpack.c.b16 %v456, %v455
    %v474 = vpack.c.b16 %v457, %v457
    %v475 = vpack.c.b16 %v459, %v458
    %v476 = vpack.c.b16 %v460, %v460
    %493 = vst [vmem:[#allocation2] sm:$0xff] %v461
    %494 = vst [vmem:[#allocation2 + $0x8] sm:$0xf] %v462
    %495 = vst [vmem:[#allocation2 + $0xc] sm:$0xff] %v463
    %496 = vst [vmem:[#allocation2 + $0x14] sm:$0xf] %v464
    %497 = vst [vmem:[#allocation2 + $0x18] sm:$0xff] %v465
    %498 = vst [vmem:[#allocation2 + $0x20] sm:$0xf] %v466
    %499 = vst [vmem:[#allocation2 + $0x24] sm:$0xff] %v467
    %500 = vst [vmem:[#allocation2 + $0x2c] sm:$0xf] %v468
    %501 = vst [vmem:[#allocation2 + $0x30] sm:$0xff] %v469
    %502 = vst [vmem:[#allocation2 + $0x38] sm:$0xf] %v470
    %503 = vst [vmem:[#allocation2 + $0x3c] sm:$0xff] %v471
    %504 = vst [vmem:[#allocation2 + $0x44] sm:$0xf] %v472
    %505 = vst [vmem:[#allocation2 + $0x48] sm:$0xff] %v473
    %506 = vst [vmem:[#allocation2 + $0x50] sm:$0xf] %v474
    %507 = vst [vmem:[#allocation2 + $0x54] sm:$0xff] %v475
    %508 = vst [vmem:[#allocation2 + $0x5c] sm:$0xf] %v476
    %v509 = vld [vmem:[#allocation8] sm:$0xff]
    %v510 = vld [vmem:[#allocation8 + $0x8] sm:$0xf]
    %v511 = vld [vmem:[#allocation8 + $0xc] sm:$0xff]
    %v512 = vld [vmem:[#allocation8 + $0x14] sm:$0xf]
    %v513 = vld [vmem:[#allocation8 + $0x18] sm:$0xff]
    %v514 = vld [vmem:[#allocation8 + $0x20] sm:$0xf]
    %v515 = vld [vmem:[#allocation8 + $0x24] sm:$0xff]
    %v516 = vld [vmem:[#allocation8 + $0x2c] sm:$0xf]
    %v517 = vld [vmem:[#allocation8 + $0x30] sm:$0xff]
    %v518 = vld [vmem:[#allocation8 + $0x38] sm:$0xf]
    %v519 = vld [vmem:[#allocation8 + $0x3c] sm:$0xff]
    %v520 = vld [vmem:[#allocation8 + $0x44] sm:$0xf]
    %v521 = vld [vmem:[#allocation8 + $0x48] sm:$0xff]
    %v522 = vld [vmem:[#allocation8 + $0x50] sm:$0xf]
    %v523 = vld [vmem:[#allocation8 + $0x54] sm:$0xff]
    %v524 = vld [vmem:[#allocation8 + $0x5c] sm:$0xf]
    %v525 = vld [vmem:[#allocation8 + $0x60] sm:$0xff]
    %v526 = vld [vmem:[#allocation8 + $0x68] sm:$0xf]
    %v527 = vld [vmem:[#allocation8 + $0x6c] sm:$0xff]
    %v528 = vld [vmem:[#allocation8 + $0x74] sm:$0xf]
    %v529 = vld [vmem:[#allocation8 + $0x78] sm:$0xff]
    %v530 = vld [vmem:[#allocation8 + $0x80] sm:$0xf]
    %v531 = vld [vmem:[#allocation8 + $0x84] sm:$0xff]
    %v532 = vld [vmem:[#allocation8 + $0x8c] sm:$0xf]
    %v533 = vld [vmem:[#allocation8 + $0x90] sm:$0xff]
    %v534 = vld [vmem:[#allocation8 + $0x98] sm:$0xf]
    %v535 = vld [vmem:[#allocation8 + $0x9c] sm:$0xff]
    %v536 = vld [vmem:[#allocation8 + $0xa4] sm:$0xf]
    %v537 = vld [vmem:[#allocation8 + $0xa8] sm:$0xff]
    %v538 = vld [vmem:[#allocation8 + $0xb0] sm:$0xf]
    %v539 = vld [vmem:[#allocation8 + $0xb4] sm:$0xff]
    %v540 = vld [vmem:[#allocation8 + $0xbc] sm:$0xf]
    %v541 = vld [vmem:[%s5] sm:$0x7]
    %v543 = vlaneseq
    %v544 = vshrl.u32 %v543, 7
    %v545 = vsub.s32 0, %v544
    %v546 = vrot.slane %v541, %v545
    %v547 = vlaneseq
    %v548 = vshrl.u32 %v547, 7
    %v549 = vsub.s32 1, %v548
    %v550 = vrot.slane %v541, %v549
    %v551 = vlaneseq
    %v552 = vshrl.u32 %v551, 7
    %v553 = vsub.s32 2, %v552
    %v554 = vrot.slane %v541, %v553
    %v558 = vld [vmem:[%s1] sm:$0xff]
    %559 = vset.pattern.permute.xlu0 0
    %560 = vperm.xlu0 %559, %v558
    %v561 = vpop.permute.xlu0 %560
    %v562 = vld [vmem:[#allocation2] sm:$0xff]
    %v563 = vld [vmem:[#allocation2 + $0x8] sm:$0xf]
    %v596 = vunpack.c.l.b16 %v509
    %v597 = vunpack.c.h.b16 %v509
    %v598 = vunpack.c.l.b16 %v510
    %v599 = vunpack.c.l.b16 %v511
    %v600 = vunpack.c.h.b16 %v511
    %v601 = vunpack.c.l.b16 %v512
    %v602 = vunpack.c.l.b16 %v513
    %v603 = vunpack.c.h.b16 %v513
    %v604 = vunpack.c.l.b16 %v514
    %v605 = vunpack.c.l.b16 %v515
    %v606 = vunpack.c.h.b16 %v515
    %v607 = vunpack.c.l.b16 %v516
    %v608 = vunpack.c.l.b16 %v517
    %v609 = vunpack.c.h.b16 %v517
    %v610 = vunpack.c.l.b16 %v518
    %v611 = vunpack.c.l.b16 %v519
    %v612 = vunpack.c.h.b16 %v519
    %v613 = vunpack.c.l.b16 %v520
    %v614 = vunpack.c.l.b16 %v521
    %v615 = vunpack.c.h.b16 %v521
    %v616 = vunpack.c.l.b16 %v522
    %v617 = vunpack.c.l.b16 %v523
    %v618 = vunpack.c.h.b16 %v523
    %v619 = vunpack.c.l.b16 %v524
    %v620 = vunpack.c.l.b16 %v525
    %v621 = vunpack.c.h.b16 %v525
    %v622 = vunpack.c.l.b16 %v526
    %v623 = vunpack.c.l.b16 %v527
    %v624 = vunpack.c.h.b16 %v527
    %v625 = vunpack.c.l.b16 %v528
    %v626 = vunpack.c.l.b16 %v529
    %v627 = vunpack.c.h.b16 %v529
    %v628 = vunpack.c.l.b16 %v530
    %v629 = vunpack.c.l.b16 %v531
    %v630 = vunpack.c.h.b16 %v531
    %v631 = vunpack.c.l.b16 %v532
    %v632 = vunpack.c.l.b16 %v533
    %v633 = vunpack.c.h.b16 %v533
    %v634 = vunpack.c.l.b16 %v534
    %v635 = vunpack.c.l.b16 %v535
    %v636 = vunpack.c.h.b16 %v535
    %v637 = vunpack.c.l.b16 %v536
    %v638 = vunpack.c.l.b16 %v537
    %v639 = vunpack.c.h.b16 %v537
    %v640 = vunpack.c.l.b16 %v538
    %v641 = vunpack.c.l.b16 %v539
    %v642 = vunpack.c.h.b16 %v539
    %v643 = vunpack.c.l.b16 %v540
    %v644 = vpack.c.b16 %v599, %v596
    %v645 = vpack.c.b16 %v600, %v597
    %v646 = vpack.c.b16 %v601, %v598
    %v647 = vpack.c.b16 %v605, %v602
    %v648 = vpack.c.b16 %v606, %v603
    %v649 = vpack.c.b16 %v607, %v604
    %v650 = vpack.c.b16 %v611, %v608
    %v651 = vpack.c.b16 %v612, %v609
    %v652 = vpack.c.b16 %v613, %v610
    %v653 = vpack.c.b16 %v617, %v614
    %v654 = vpack.c.b16 %v618, %v615
    %v655 = vpack.c.b16 %v619, %v616
    %v656 = vpack.c.b16 %v623, %v620
    %v657 = vpack.c.b16 %v624, %v621
    %v658 = vpack.c.b16 %v625, %v622
    %v659 = vpack.c.b16 %v629, %v626
    %v660 = vpack.c.b16 %v630, %v627
    %v661 = vpack.c.b16 %v631, %v628
    %v662 = vpack.c.b16 %v635, %v632
    %v663 = vpack.c.b16 %v636, %v633
    %v664 = vpack.c.b16 %v637, %v634
    %v665 = vpack.c.b16 %v641, %v638
    %v666 = vpack.c.b16 %v642, %v639
    %v667 = vpack.c.b16 %v643, %v640
    %692 = vmatprep.subr.bf16.mxu0 %v666
    %693 = vmatpush1.bf16.msra.mxu0 %v665
    %694 = vmatprep.subr.bf16.mxu0 %v663
    %695 = vmatpush1.bf16.msra.mxu0 %v662
    %696 = vmatprep.subr.bf16.mxu0 %v660
    %697 = vmatpush1.bf16.msra.mxu0 %v659
    %698 = vmatprep.subr.bf16.mxu0 %v657
    %699 = vmatpush1.bf16.msra.mxu0 %v656
    %700 = vmatprep.subr.bf16.mxu0 %v654
    %701 = vmatpush1.bf16.msra.mxu0 %v653
    %702 = vmatprep.subr.bf16.mxu0 %v651
    %703 = vmatpush1.bf16.msra.mxu0 %v650
    %704 = vmatprep.subr.bf16.mxu0 %v648
    %705 = vmatpush1.bf16.msra.mxu0 %v647
    %706 = vmatprep.subr.bf16.mxu0 %v645
    %707 = vmatpush1.bf16.msra.mxu0 %v644
    %708 = vmatprep.subr.bf16.mxu0 0
    %709 = vmatpush2.bf16.msra.mxu0 0
    %710 = vmatprep.subr.bf16.mxu0 0
    %711 = vmatpush2.bf16.msra.mxu0 0
    %712 = vmatprep.subr.bf16.mxu0 0
    %713 = vmatpush2.bf16.msra.mxu0 0
    %714 = vmatprep.subr.bf16.mxu0 0
    %715 = vmatpush2.bf16.msra.mxu0 0
    %716 = vmatprep.subr.bf16.mxu0 0
    %717 = vmatpush2.bf16.msra.mxu0 0
    %718 = vmatprep.subr.bf16.mxu0 0
    %719 = vmatpush2.bf16.msra.mxu0 0
    %720 = vmatprep.subr.bf16.mxu0 0
    %721 = vmatpush2.bf16.msra.mxu0 0
    %722 = vmatprep.subr.bf16.mxu0 0
    %723 = vmatpush2.bf16.msra.mxu0 0
    %724 = vmatprep.mubr.bf16.mxu0 0
    %725 = vmatmul.mubr.bf16.gmra.mxu0 0
    %v726 = vpop.f32.mrf.mxu0
    %v727 = vadd.f32 %v546, %v726
    %v728 = vpop.f32.mrf.mxu0
    %v729 = vadd.f32 %v550, %v728
    %v730 = vpop.f32.mrf.mxu0
    %v731 = vpop.f32.mrf.mxu0
    %732 = vdwg.mxu0
    %733 = vmatprep.subr.bf16.mxu0 0
    %734 = vmatpush1.bf16.msra.mxu0 %v667
    %735 = vmatprep.subr.bf16.mxu0 0
    %736 = vmatpush1.bf16.msra.mxu0 %v664
    %737 = vmatprep.subr.bf16.mxu0 0
    %738 = vmatpush1.bf16.msra.mxu0 %v661
    %739 = vmatprep.subr.bf16.mxu0 0
    %740 = vmatpush1.bf16.msra.mxu0 %v658
    %741 = vmatprep.subr.bf16.mxu0 0
    %742 = vmatpush1.bf16.msra.mxu0 %v655
    %743 = vmatprep.subr.bf16.mxu0 0
    %744 = vmatpush1.bf16.msra.mxu0 %v652
    %745 = vmatprep.subr.bf16.mxu0 0
    %746 = vmatpush1.bf16.msra.mxu0 %v649
    %747 = vmatprep.subr.bf16.mxu0 0
    %748 = vmatpush1.bf16.msra.mxu0 %v646
    %749 = vmatprep.subr.bf16.mxu0 0
    %750 = vmatpush2.bf16.msra.mxu0 0
    %751 = vmatprep.subr.bf16.mxu0 0
    %752 = vmatpush2.bf16.msra.mxu0 0
    %753 = vmatprep.subr.bf16.mxu0 0
    %754 = vmatpush2.bf16.msra.mxu0 0
    %755 = vmatprep.subr.bf16.mxu0 0
    %756 = vmatpush2.bf16.msra.mxu0 0
    %757 = vmatprep.subr.bf16.mxu0 0
    %758 = vmatpush2.bf16.msra.mxu0 0
    %759 = vmatprep.subr.bf16.mxu0 0
    %760 = vmatpush2.bf16.msra.mxu0 0
    %761 = vmatprep.subr.bf16.mxu0 0
    %762 = vmatpush2.bf16.msra.mxu0 0
    %763 = vmatprep.subr.bf16.mxu0 0
    %764 = vmatpush2.bf16.msra.mxu0 0
    %765 = vmatprep.mubr.bf16.mxu0 0
    %766 = vmatmul.mubr.bf16.gmra.mxu0 0
    %v767 = vpop.f32.mrf.mxu0
    %v768 = vadd.f32 %v554, %v767
    %v769 = vpop.f32.mrf.mxu0
    %v770 = vpop.f32.mrf.mxu0
    %v771 = vpop.f32.mrf.mxu0
    %772 = vdwg.mxu0
    %v773 = vunpack.c.l.bf16 %v562
    %v774 = vunpack.c.h.bf16 %v562
    %v775 = vunpack.c.l.bf16 %v563
    %v776 = vadd.f32 %v773, %v727
    %v777 = vxor.u32 %v776, 2147483648
    %v778 = vmul.f32 %v777, 1.442695
    %v779 = vpow.pop %v778
    %v780 = vadd.f32 %v779, 1.0
    %v781 = vrcp.pop %v780
    %v782 = vmul.f32 1.0, %v781
    %v783 = vadd.f32 %v774, %v729
    %v784 = vxor.u32 %v783, 2147483648
    %v785 = vmul.f32 %v784, 1.442695
    %v786 = vpow.pop %v785
    %v787 = vadd.f32 %v786, 1.0
    %v788 = vrcp.pop %v787
    %v789 = vmul.f32 1.0, %v788
    %v790 = vmul.f32 %v782, %v768
    %v791 = vadd.f32 %v775, %v790
    %v792 = vtanh.pop %v791
    %v793 = vsub.f32 1.0, %v789
    %v794 = vmul.f32 %v793, %v792
    %v795 = vmul.f32 %v789, 0.0
    %v796 = vadd.f32 %v794, %v795
    %vm797 = vcmp.gt.s32.totalorder %v561, 0
    %v798 = vsel %vm797, %v796, 0.0
    %v799 = vld [vmem:[#allocation2 + $0xc] sm:$0xff]
    %v800 = vld [vmem:[#allocation2 + $0x14] sm:$0xf]
    %v801 = vpack.c.bf16 %v798, %v798
    %802 = vmatprep.subr.bf16.mxu0 %v666
    %803 = vmatpush1.bf16.msra.mxu0 %v665
    %804 = vmatprep.subr.bf16.mxu0 %v663
    %805 = vmatpush1.bf16.msra.mxu0 %v662
    %806 = vmatprep.subr.bf16.mxu0 %v660
    %807 = vmatpush1.bf16.msra.mxu0 %v659
    %808 = vmatprep.subr.bf16.mxu0 %v657
    %809 = vmatpush1.bf16.msra.mxu0 %v656
    %810 = vmatprep.subr.bf16.mxu0 %v654
    %811 = vmatpush1.bf16.msra.mxu0 %v653
    %812 = vmatprep.subr.bf16.mxu0 %v651
    %813 = vmatpush1.bf16.msra.mxu0 %v650
    %814 = vmatprep.subr.bf16.mxu0 %v648
    %815 = vmatpush1.bf16.msra.mxu0 %v647
    %816 = vmatprep.subr.bf16.mxu0 %v645
    %817 = vmatpush1.bf16.msra.mxu0 %v644
    %818 = vmatprep.subr.bf16.mxu0 0
    %819 = vmatpush2.bf16.msra.mxu0 0
    %820 = vmatprep.subr.bf16.mxu0 0
    %821 = vmatpush2.bf16.msra.mxu0 0
    %822 = vmatprep.subr.bf16.mxu0 0
    %823 = vmatpush2.bf16.msra.mxu0 0
    %824 = vmatprep.subr.bf16.mxu0 0
    %825 = vmatpush2.bf16.msra.mxu0 0
    %826 = vmatprep.subr.bf16.mxu0 0
    %827 = vmatpush2.bf16.msra.mxu0 0
    %828 = vmatprep.subr.bf16.mxu0 0
    %829 = vmatpush2.bf16.msra.mxu0 0
    %830 = vmatprep.subr.bf16.mxu0 0
    %831 = vmatpush2.bf16.msra.mxu0 0
    %832 = vmatprep.subr.bf16.mxu0 0
    %833 = vmatpush2.bf16.msra.mxu0 0
    %834 = vmatprep.mubr.bf16.mxu0 0
    %835 = vmatmul.mubr.bf16.gmra.mxu0 %v801
    %v836 = vpop.f32.mrf.mxu0
    %v837 = vadd.f32 %v546, %v836
    %v838 = vpop.f32.mrf.mxu0
    %v839 = vadd.f32 %v550, %v838
    %v840 = vpop.f32.mrf.mxu0
    %v841 = vpop.f32.mrf.mxu0
    %842 = vdwg.mxu0
    %843 = vmatprep.subr.bf16.mxu0 0
    %844 = vmatpush1.bf16.msra.mxu0 %v667
    %845 = vmatprep.subr.bf16.mxu0 0
    %846 = vmatpush1.bf16.msra.mxu0 %v664
    %847 = vmatprep.subr.bf16.mxu0 0
    %848 = vmatpush1.bf16.msra.mxu0 %v661
    %849 = vmatprep.subr.bf16.mxu0 0
    %850 = vmatpush1.bf16.msra.mxu0 %v658
    %851 = vmatprep.subr.bf16.mxu0 0
    %852 = vmatpush1.bf16.msra.mxu0 %v655
    %853 = vmatprep.subr.bf16.mxu0 0
    %854 = vmatpush1.bf16.msra.mxu0 %v652
    %855 = vmatprep.subr.bf16.mxu0 0
    %856 = vmatpush1.bf16.msra.mxu0 %v649
    %857 = vmatprep.subr.bf16.mxu0 0
    %858 = vmatpush1.bf16.msra.mxu0 %v646
    %859 = vmatprep.subr.bf16.mxu0 0
    %860 = vmatpush2.bf16.msra.mxu0 0
    %861 = vmatprep.subr.bf16.mxu0 0
    %862 = vmatpush2.bf16.msra.mxu0 0
    %863 = vmatprep.subr.bf16.mxu0 0
    %864 = vmatpush2.bf16.msra.mxu0 0
    %865 = vmatprep.subr.bf16.mxu0 0
    %866 = vmatpush2.bf16.msra.mxu0 0
    %867 = vmatprep.subr.bf16.mxu0 0
    %868 = vmatpush2.bf16.msra.mxu0 0
    %869 = vmatprep.subr.bf16.mxu0 0
    %870 = vmatpush2.bf16.msra.mxu0 0
    %871 = vmatprep.subr.bf16.mxu0 0
    %872 = vmatpush2.bf16.msra.mxu0 0
    %873 = vmatprep.subr.bf16.mxu0 0
    %874 = vmatpush2.bf16.msra.mxu0 0
    %875 = vmatprep.mubr.bf16.mxu0 0
    %876 = vmatmul.mubr.bf16.gmra.mxu0 %v801
    %v877 = vpop.f32.mrf.mxu0
    %v878 = vadd.f32 %v554, %v877
    %v879 = vpop.f32.mrf.mxu0
    %v880 = vpop.f32.mrf.mxu0
    %v881 = vpop.f32.mrf.mxu0
    %882 = vdwg.mxu0
    %v883 = vunpack.c.l.bf16 %v799
    %v884 = vunpack.c.h.bf16 %v799
    %v885 = vunpack.c.l.bf16 %v800
    %v886 = vadd.f32 %v883, %v837
    %v887 = vxor.u32 %v886, 2147483648
    %v888 = vmul.f32 %v887, 1.442695
    %v889 = vpow.pop %v888
    %v890 = vadd.f32 %v889, 1.0
    %v891 = vrcp.pop %v890
    %v892 = vmul.f32 1.0, %v891
    %v893 = vadd.f32 %v884, %v839
    %v894 = vxor.u32 %v893, 2147483648
    %v895 = vmul.f32 %v894, 1.442695
    %v896 = vpow.pop %v895
    %v897 = vadd.f32 %v896, 1.0
    %v898 = vrcp.pop %v897
    %v899 = vmul.f32 1.0, %v898
    %v900 = vmul.f32 %v892, %v878
    %v901 = vadd.f32 %v885, %v900
    %v902 = vtanh.pop %v901
    %v903 = vsub.f32 1.0, %v899
    %v904 = vmul.f32 %v903, %v902
    %v905 = vmul.f32 %v899, %v798
    %v906 = vadd.f32 %v904, %v905
    %vm907 = vcmp.gt.s32.totalorder %v561, 1
    %v908 = vsel %vm907, %v906, %v798
    %v909 = vld [vmem:[#allocation2 + $0x18] sm:$0xff]
    %v910 = vld [vmem:[#allocation2 + $0x20] sm:$0xf]
    %v911 = vpack.c.bf16 %v908, %v908
    %912 = vmatprep.subr.bf16.mxu0 %v666
    %913 = vmatpush1.bf16.msra.mxu0 %v665
    %914 = vmatprep.subr.bf16.mxu0 %v663
    %915 = vmatpush1.bf16.msra.mxu0 %v662
    %916 = vmatprep.subr.bf16.mxu0 %v660
    %917 = vmatpush1.bf16.msra.mxu0 %v659
    %918 = vmatprep.subr.bf16.mxu0 %v657
    %919 = vmatpush1.bf16.msra.mxu0 %v656
    %920 = vmatprep.subr.bf16.mxu0 %v654
    %921 = vmatpush1.bf16.msra.mxu0 %v653
    %922 = vmatprep.subr.bf16.mxu0 %v651
    %923 = vmatpush1.bf16.msra.mxu0 %v650
    %924 = vmatprep.subr.bf16.mxu0 %v648
    %925 = vmatpush1.bf16.msra.mxu0 %v647
    %926 = vmatprep.subr.bf16.mxu0 %v645
    %927 = vmatpush1.bf16.msra.mxu0 %v644
    %928 = vmatprep.subr.bf16.mxu0 0
    %929 = vmatpush2.bf16.msra.mxu0 0
    %930 = vmatprep.subr.bf16.mxu0 0
    %931 = vmatpush2.bf16.msra.mxu0 0
    %932 = vmatprep.subr.bf16.mxu0 0
    %933 = vmatpush2.bf16.msra.mxu0 0
    %934 = vmatprep.subr.bf16.mxu0 0
    %935 = vmatpush2.bf16.msra.mxu0 0
    %936 = vmatprep.subr.bf16.mxu0 0
    %937 = vmatpush2.bf16.msra.mxu0 0
    %938 = vmatprep.subr.bf16.mxu0 0
    %939 = vmatpush2.bf16.msra.mxu0 0
    %940 = vmatprep.subr.bf16.mxu0 0
    %941 = vmatpush2.bf16.msra.mxu0 0
    %942 = vmatprep.subr.bf16.mxu0 0
    %943 = vmatpush2.bf16.msra.mxu0 0
    %944 = vmatprep.mubr.bf16.mxu0 0
    %945 = vmatmul.mubr.bf16.gmra.mxu0 %v911
    %v946 = vpop.f32.mrf.mxu0
    %v947 = vadd.f32 %v546, %v946
    %v948 = vpop.f32.mrf.mxu0
    %v949 = vadd.f32 %v550, %v948
    %v950 = vpop.f32.mrf.mxu0
    %v951 = vpop.f32.mrf.mxu0
    %952 = vdwg.mxu0
    %953 = vmatprep.subr.bf16.mxu0 0
    %954 = vmatpush1.bf16.msra.mxu0 %v667
    %955 = vmatprep.subr.bf16.mxu0 0
    %956 = vmatpush1.bf16.msra.mxu0 %v664
    %957 = vmatprep.subr.bf16.mxu0 0
    %958 = vmatpush1.bf16.msra.mxu0 %v661
    %959 = vmatprep.subr.bf16.mxu0 0
    %960 = vmatpush1.bf16.msra.mxu0 %v658
    %961 = vmatprep.subr.bf16.mxu0 0
    %962 = vmatpush1.bf16.msra.mxu0 %v655
    %963 = vmatprep.subr.bf16.mxu0 0
    %964 = vmatpush1.bf16.msra.mxu0 %v652
    %965 = vmatprep.subr.bf16.mxu0 0
    %966 = vmatpush1.bf16.msra.mxu0 %v649
    %967 = vmatprep.subr.bf16.mxu0 0
    %968 = vmatpush1.bf16.msra.mxu0 %v646
    %969 = vmatprep.subr.bf16.mxu0 0
    %970 = vmatpush2.bf16.msra.mxu0 0
    %971 = vmatprep.subr.bf16.mxu0 0
    %972 = vmatpush2.bf16.msra.mxu0 0
    %973 = vmatprep.subr.bf16.mxu0 0
    %974 = vmatpush2.bf16.msra.mxu0 0
    %975 = vmatprep.subr.bf16.mxu0 0
    %976 = vmatpush2.bf16.msra.mxu0 0
    %977 = vmatprep.subr.bf16.mxu0 0
    %978 = vmatpush2.bf16.msra.mxu0 0
    %979 = vmatprep.subr.bf16.mxu0 0
    %980 = vmatpush2.bf16.msra.mxu0 0
    %981 = vmatprep.subr.bf16.mxu0 0
    %982 = vmatpush2.bf16.msra.mxu0 0
    %983 = vmatprep.subr.bf16.mxu0 0
    %984 = vmatpush2.bf16.msra.mxu0 0
    %985 = vmatprep.mubr.bf16.mxu0 0
    %986 = vmatmul.mubr.bf16.gmra.mxu0 %v911
    %v987 = vpop.f32.mrf.mxu0
    %v988 = vadd.f32 %v554, %v987
    %v989 = vpop.f32.mrf.mxu0
    %v990 = vpop.f32.mrf.mxu0
    %v991 = vpop.f32.mrf.mxu0
    %992 = vdwg.mxu0
    %v993 = vunpack.c.l.bf16 %v909
    %v994 = vunpack.c.h.bf16 %v909
    %v995 = vunpack.c.l.bf16 %v910
    %v996 = vadd.f32 %v993, %v947
    %v997 = vxor.u32 %v996, 2147483648
    %v998 = vmul.f32 %v997, 1.442695
    %v999 = vpow.pop %v998
    %v1000 = vadd.f32 %v999, 1.0
    %v1001 = vrcp.pop %v1000
    %v1002 = vmul.f32 1.0, %v1001
    %v1003 = vadd.f32 %v994, %v949
    %v1004 = vxor.u32 %v1003, 2147483648
    %v1005 = vmul.f32 %v1004, 1.442695
    %v1006 = vpow.pop %v1005
    %v1007 = vadd.f32 %v1006, 1.0
    %v1008 = vrcp.pop %v1007
    %v1009 = vmul.f32 1.0, %v1008
    %v1010 = vmul.f32 %v1002, %v988
    %v1011 = vadd.f32 %v995, %v1010
    %v1012 = vtanh.pop %v1011
    %v1013 = vsub.f32 1.0, %v1009
    %v1014 = vmul.f32 %v1013, %v1012
    %v1015 = vmul.f32 %v1009, %v908
    %v1016 = vadd.f32 %v1014, %v1015
    %vm1017 = vcmp.gt.s32.totalorder %v561, 2
    %v1018 = vsel %vm1017, %v1016, %v908
    %v1019 = vld [vmem:[#allocation2 + $0x24] sm:$0xff]
    %v1020 = vld [vmem:[#allocation2 + $0x2c] sm:$0xf]
    %v1021 = vpack.c.bf16 %v1018, %v1018
    %1022 = vmatprep.subr.bf16.mxu0 %v666
    %1023 = vmatpush1.bf16.msra.mxu0 %v665
    %1024 = vmatprep.subr.bf16.mxu0 %v663
    %1025 = vmatpush1.bf16.msra.mxu0 %v662
    %1026 = vmatprep.subr.bf16.mxu0 %v660
    %1027 = vmatpush1.bf16.msra.mxu0 %v659
    %1028 = vmatprep.subr.bf16.mxu0 %v657
    %1029 = vmatpush1.bf16.msra.mxu0 %v656
    %1030 = vmatprep.subr.bf16.mxu0 %v654
    %1031 = vmatpush1.bf16.msra.mxu0 %v653
    %1032 = vmatprep.subr.bf16.mxu0 %v651
    %1033 = vmatpush1.bf16.msra.mxu0 %v650
    %1034 = vmatprep.subr.bf16.mxu0 %v648
    %1035 = vmatpush1.bf16.msra.mxu0 %v647
    %1036 = vmatprep.subr.bf16.mxu0 %v645
    %1037 = vmatpush1.bf16.msra.mxu0 %v644
    %1038 = vmatprep.subr.bf16.mxu0 0
    %1039 = vmatpush2.bf16.msra.mxu0 0
    %1040 = vmatprep.subr.bf16.mxu0 0
    %1041 = vmatpush2.bf16.msra.mxu0 0
    %1042 = vmatprep.subr.bf16.mxu0 0
    %1043 = vmatpush2.bf16.msra.mxu0 0
    %1044 = vmatprep.subr.bf16.mxu0 0
    %1045 = vmatpush2.bf16.msra.mxu0 0
    %1046 = vmatprep.subr.bf16.mxu0 0
    %1047 = vmatpush2.bf16.msra.mxu0 0
    %1048 = vmatprep.subr.bf16.mxu0 0
    %1049 = vmatpush2.bf16.msra.mxu0 0
    %1050 = vmatprep.subr.bf16.mxu0 0
    %1051 = vmatpush2.bf16.msra.mxu0 0
    %1052 = vmatprep.subr.bf16.mxu0 0
    %1053 = vmatpush2.bf16.msra.mxu0 0
    %1054 = vmatprep.mubr.bf16.mxu0 0
    %1055 = vmatmul.mubr.bf16.gmra.mxu0 %v1021
    %v1056 = vpop.f32.mrf.mxu0
    %v1057 = vadd.f32 %v546, %v1056
    %v1058 = vpop.f32.mrf.mxu0
    %v1059 = vadd.f32 %v550, %v1058
    %v1060 = vpop.f32.mrf.mxu0
    %v1061 = vpop.f32.mrf.mxu0
    %1062 = vdwg.mxu0
    %1063 = vmatprep.subr.bf16.mxu0 0
    %1064 = vmatpush1.bf16.msra.mxu0 %v667
    %1065 = vmatprep.subr.bf16.mxu0 0
    %1066 = vmatpush1.bf16.msra.mxu0 %v664
    %1067 = vmatprep.subr.bf16.mxu0 0
    %1068 = vmatpush1.bf16.msra.mxu0 %v661
    %1069 = vmatprep.subr.bf16.mxu0 0
    %1070 = vmatpush1.bf16.msra.mxu0 %v658
    %1071 = vmatprep.subr.bf16.mxu0 0
    %1072 = vmatpush1.bf16.msra.mxu0 %v655
    %1073 = vmatprep.subr.bf16.mxu0 0
    %1074 = vmatpush1.bf16.msra.mxu0 %v652
    %1075 = vmatprep.subr.bf16.mxu0 0
    %1076 = vmatpush1.bf16.msra.mxu0 %v649
    %1077 = vmatprep.subr.bf16.mxu0 0
    %1078 = vmatpush1.bf16.msra.mxu0 %v646
    %1079 = vmatprep.subr.bf16.mxu0 0
    %1080 = vmatpush2.bf16.msra.mxu0 0
    %1081 = vmatprep.subr.bf16.mxu0 0
    %1082 = vmatpush2.bf16.msra.mxu0 0
    %1083 = vmatprep.subr.bf16.mxu0 0
    %1084 = vmatpush2.bf16.msra.mxu0 0
    %1085 = vmatprep.subr.bf16.mxu0 0
    %1086 = vmatpush2.bf16.msra.mxu0 0
    %1087 = vmatprep.subr.bf16.mxu0 0
    %1088 = vmatpush2.bf16.msra.mxu0 0
    %1089 = vmatprep.subr.bf16.mxu0 0
    %1090 = vmatpush2.bf16.msra.mxu0 0
    %1091 = vmatprep.subr.bf16.mxu0 0
    %1092 = vmatpush2.bf16.msra.mxu0 0
    %1093 = vmatprep.subr.bf16.mxu0 0
    %1094 = vmatpush2.bf16.msra.mxu0 0
    %1095 = vmatprep.mubr.bf16.mxu0 0
    %1096 = vmatmul.mubr.bf16.gmra.mxu0 %v1021
    %v1097 = vpop.f32.mrf.mxu0
    %v1098 = vadd.f32 %v554, %v1097
    %v1099 = vpop.f32.mrf.mxu0
    %v1100 = vpop.f32.mrf.mxu0
    %v1101 = vpop.f32.mrf.mxu0
    %1102 = vdwg.mxu0
    %v1103 = vunpack.c.l.bf16 %v1019
    %v1104 = vunpack.c.h.bf16 %v1019
    %v1105 = vunpack.c.l.bf16 %v1020
    %v1106 = vadd.f32 %v1103, %v1057
    %v1107 = vxor.u32 %v1106, 2147483648
    %v1108 = vmul.f32 %v1107, 1.442695
    %v1109 = vpow.pop %v1108
    %v1110 = vadd.f32 %v1109, 1.0
    %v1111 = vrcp.pop %v1110
    %v1112 = vmul.f32 1.0, %v1111
    %v1113 = vadd.f32 %v1104, %v1059
    %v1114 = vxor.u32 %v1113, 2147483648
    %v1115 = vmul.f32 %v1114, 1.442695
    %v1116 = vpow.pop %v1115
    %v1117 = vadd.f32 %v1116, 1.0
    %v1118 = vrcp.pop %v1117
    %v1119 = vmul.f32 1.0, %v1118
    %v1120 = vmul.f32 %v1112, %v1098
    %v1121 = vadd.f32 %v1105, %v1120
    %v1122 = vtanh.pop %v1121
    %v1123 = vsub.f32 1.0, %v1119
    %v1124 = vmul.f32 %v1123, %v1122
    %v1125 = vmul.f32 %v1119, %v1018
    %v1126 = vadd.f32 %v1124, %v1125
    %vm1127 = vcmp.gt.s32.totalorder %v561, 3
    %v1128 = vsel %vm1127, %v1126, %v1018
    %v1129 = vld [vmem:[#allocation2 + $0x30] sm:$0xff]
    %v1130 = vld [vmem:[#allocation2 + $0x38] sm:$0xf]
    %v1131 = vpack.c.bf16 %v1128, %v1128
    %1132 = vmatprep.subr.bf16.mxu0 %v666
    %1133 = vmatpush1.bf16.msra.mxu0 %v665
    %1134 = vmatprep.subr.bf16.mxu0 %v663
    %1135 = vmatpush1.bf16.msra.mxu0 %v662
    %1136 = vmatprep.subr.bf16.mxu0 %v660
    %1137 = vmatpush1.bf16.msra.mxu0 %v659
    %1138 = vmatprep.subr.bf16.mxu0 %v657
    %1139 = vmatpush1.bf16.msra.mxu0 %v656
    %1140 = vmatprep.subr.bf16.mxu0 %v654
    %1141 = vmatpush1.bf16.msra.mxu0 %v653
    %1142 = vmatprep.subr.bf16.mxu0 %v651
    %1143 = vmatpush1.bf16.msra.mxu0 %v650
    %1144 = vmatprep.subr.bf16.mxu0 %v648
    %1145 = vmatpush1.bf16.msra.mxu0 %v647
    %1146 = vmatprep.subr.bf16.mxu0 %v645
    %1147 = vmatpush1.bf16.msra.mxu0 %v644
    %1148 = vmatprep.subr.bf16.mxu0 0
    %1149 = vmatpush2.bf16.msra.mxu0 0
    %1150 = vmatprep.subr.bf16.mxu0 0
    %1151 = vmatpush2.bf16.msra.mxu0 0
    %1152 = vmatprep.subr.bf16.mxu0 0
    %1153 = vmatpush2.bf16.msra.mxu0 0
    %1154 = vmatprep.subr.bf16.mxu0 0
    %1155 = vmatpush2.bf16.msra.mxu0 0
    %1156 = vmatprep.subr.bf16.mxu0 0
    %1157 = vmatpush2.bf16.msra.mxu0 0
    %1158 = vmatprep.subr.bf16.mxu0 0
    %1159 = vmatpush2.bf16.msra.mxu0 0
    %1160 = vmatprep.subr.bf16.mxu0 0
    %1161 = vmatpush2.bf16.msra.mxu0 0
    %1162 = vmatprep.subr.bf16.mxu0 0
    %1163 = vmatpush2.bf16.msra.mxu0 0
    %1164 = vmatprep.mubr.bf16.mxu0 0
    %1165 = vmatmul.mubr.bf16.gmra.mxu0 %v1131
    %v1166 = vpop.f32.mrf.mxu0
    %v1167 = vadd.f32 %v546, %v1166
    %v1168 = vpop.f32.mrf.mxu0
    %v1169 = vadd.f32 %v550, %v1168
    %v1170 = vpop.f32.mrf.mxu0
    %v1171 = vpop.f32.mrf.mxu0
    %1172 = vdwg.mxu0
    %1173 = vmatprep.subr.bf16.mxu0 0
    %1174 = vmatpush1.bf16.msra.mxu0 %v667
    %1175 = vmatprep.subr.bf16.mxu0 0
    %1176 = vmatpush1.bf16.msra.mxu0 %v664
    %1177 = vmatprep.subr.bf16.mxu0 0
    %1178 = vmatpush1.bf16.msra.mxu0 %v661
    %1179 = vmatprep.subr.bf16.mxu0 0
    %1180 = vmatpush1.bf16.msra.mxu0 %v658
    %1181 = vmatprep.subr.bf16.mxu0 0
    %1182 = vmatpush1.bf16.msra.mxu0 %v655
    %1183 = vmatprep.subr.bf16.mxu0 0
    %1184 = vmatpush1.bf16.msra.mxu0 %v652
    %1185 = vmatprep.subr.bf16.mxu0 0
    %1186 = vmatpush1.bf16.msra.mxu0 %v649
    %1187 = vmatprep.subr.bf16.mxu0 0
    %1188 = vmatpush1.bf16.msra.mxu0 %v646
    %1189 = vmatprep.subr.bf16.mxu0 0
    %1190 = vmatpush2.bf16.msra.mxu0 0
    %1191 = vmatprep.subr.bf16.mxu0 0
    %1192 = vmatpush2.bf16.msra.mxu0 0
    %1193 = vmatprep.subr.bf16.mxu0 0
    %1194 = vmatpush2.bf16.msra.mxu0 0
    %1195 = vmatprep.subr.bf16.mxu0 0
    %1196 = vmatpush2.bf16.msra.mxu0 0
    %1197 = vmatprep.subr.bf16.mxu0 0
    %1198 = vmatpush2.bf16.msra.mxu0 0
    %1199 = vmatprep.subr.bf16.mxu0 0
    %1200 = vmatpush2.bf16.msra.mxu0 0
    %1201 = vmatprep.subr.bf16.mxu0 0
    %1202 = vmatpush2.bf16.msra.mxu0 0
    %1203 = vmatprep.subr.bf16.mxu0 0
    %1204 = vmatpush2.bf16.msra.mxu0 0
    %1205 = vmatprep.mubr.bf16.mxu0 0
    %1206 = vmatmul.mubr.bf16.gmra.mxu0 %v1131
    %v1207 = vpop.f32.mrf.mxu0
    %v1208 = vadd.f32 %v554, %v1207
    %v1209 = vpop.f32.mrf.mxu0
    %v1210 = vpop.f32.mrf.mxu0
    %v1211 = vpop.f32.mrf.mxu0
    %1212 = vdwg.mxu0
    %v1213 = vunpack.c.l.bf16 %v1129
    %v1214 = vunpack.c.h.bf16 %v1129
    %v1215 = vunpack.c.l.bf16 %v1130
    %v1216 = vadd.f32 %v1213, %v1167
    %v1217 = vxor.u32 %v1216, 2147483648
    %v1218 = vmul.f32 %v1217, 1.442695
    %v1219 = vpow.pop %v1218
    %v1220 = vadd.f32 %v1219, 1.0
    %v1221 = vrcp.pop %v1220
    %v1222 = vmul.f32 1.0, %v1221
    %v1223 = vadd.f32 %v1214, %v1169
    %v1224 = vxor.u32 %v1223, 2147483648
    %v1225 = vmul.f32 %v1224, 1.442695
    %v1226 = vpow.pop %v1225
    %v1227 = vadd.f32 %v1226, 1.0
    %v1228 = vrcp.pop %v1227
    %v1229 = vmul.f32 1.0, %v1228
    %v1230 = vmul.f32 %v1222, %v1208
    %v1231 = vadd.f32 %v1215, %v1230
    %v1232 = vtanh.pop %v1231
    %v1233 = vsub.f32 1.0, %v1229
    %v1234 = vmul.f32 %v1233, %v1232
    %v1235 = vmul.f32 %v1229, %v1128
    %v1236 = vadd.f32 %v1234, %v1235
    %vm1237 = vcmp.gt.s32.totalorder %v561, 4
    %v1238 = vsel %vm1237, %v1236, %v1128
    %v1239 = vld [vmem:[#allocation2 + $0x3c] sm:$0xff]
    %v1240 = vld [vmem:[#allocation2 + $0x44] sm:$0xf]
    %v1241 = vpack.c.bf16 %v1238, %v1238
    %1242 = vmatprep.subr.bf16.mxu0 %v666
    %1243 = vmatpush1.bf16.msra.mxu0 %v665
    %1244 = vmatprep.subr.bf16.mxu0 %v663
    %1245 = vmatpush1.bf16.msra.mxu0 %v662
    %1246 = vmatprep.subr.bf16.mxu0 %v660
    %1247 = vmatpush1.bf16.msra.mxu0 %v659
    %1248 = vmatprep.subr.bf16.mxu0 %v657
    %1249 = vmatpush1.bf16.msra.mxu0 %v656
    %1250 = vmatprep.subr.bf16.mxu0 %v654
    %1251 = vmatpush1.bf16.msra.mxu0 %v653
    %1252 = vmatprep.subr.bf16.mxu0 %v651
    %1253 = vmatpush1.bf16.msra.mxu0 %v650
    %1254 = vmatprep.subr.bf16.mxu0 %v648
    %1255 = vmatpush1.bf16.msra.mxu0 %v647
    %1256 = vmatprep.subr.bf16.mxu0 %v645
    %1257 = vmatpush1.bf16.msra.mxu0 %v644
    %1258 = vmatprep.subr.bf16.mxu0 0
    %1259 = vmatpush2.bf16.msra.mxu0 0
    %1260 = vmatprep.subr.bf16.mxu0 0
    %1261 = vmatpush2.bf16.msra.mxu0 0
    %1262 = vmatprep.subr.bf16.mxu0 0
    %1263 = vmatpush2.bf16.msra.mxu0 0
    %1264 = vmatprep.subr.bf16.mxu0 0
    %1265 = vmatpush2.bf16.msra.mxu0 0
    %1266 = vmatprep.subr.bf16.mxu0 0
    %1267 = vmatpush2.bf16.msra.mxu0 0
    %1268 = vmatprep.subr.bf16.mxu0 0
    %1269 = vmatpush2.bf16.msra.mxu0 0
    %1270 = vmatprep.subr.bf16.mxu0 0
    %1271 = vmatpush2.bf16.msra.mxu0 0
    %1272 = vmatprep.subr.bf16.mxu0 0
    %1273 = vmatpush2.bf16.msra.mxu0 0
    %1274 = vmatprep.mubr.bf16.mxu0 0
    %1275 = vmatmul.mubr.bf16.gmra.mxu0 %v1241
    %v1276 = vpop.f32.mrf.mxu0
    %v1277 = vadd.f32 %v546, %v1276
    %v1278 = vpop.f32.mrf.mxu0
    %v1279 = vadd.f32 %v550, %v1278
    %v1280 = vpop.f32.mrf.mxu0
    %v1281 = vpop.f32.mrf.mxu0
    %1282 = vdwg.mxu0
    %1283 = vmatprep.subr.bf16.mxu0 0
    %1284 = vmatpush1.bf16.msra.mxu0 %v667
    %1285 = vmatprep.subr.bf16.mxu0 0
    %1286 = vmatpush1.bf16.msra.mxu0 %v664
    %1287 = vmatprep.subr.bf16.mxu0 0
    %1288 = vmatpush1.bf16.msra.mxu0 %v661
    %1289 = vmatprep.subr.bf16.mxu0 0
    %1290 = vmatpush1.bf16.msra.mxu0 %v658
    %1291 = vmatprep.subr.bf16.mxu0 0
    %1292 = vmatpush1.bf16.msra.mxu0 %v655
    %1293 = vmatprep.subr.bf16.mxu0 0
    %1294 = vmatpush1.bf16.msra.mxu0 %v652
    %1295 = vmatprep.subr.bf16.mxu0 0
    %1296 = vmatpush1.bf16.msra.mxu0 %v649
    %1297 = vmatprep.subr.bf16.mxu0 0
    %1298 = vmatpush1.bf16.msra.mxu0 %v646
    %1299 = vmatprep.subr.bf16.mxu0 0
    %1300 = vmatpush2.bf16.msra.mxu0 0
    %1301 = vmatprep.subr.bf16.mxu0 0
    %1302 = vmatpush2.bf16.msra.mxu0 0
    %1303 = vmatprep.subr.bf16.mxu0 0
    %1304 = vmatpush2.bf16.msra.mxu0 0
    %1305 = vmatprep.subr.bf16.mxu0 0
    %1306 = vmatpush2.bf16.msra.mxu0 0
    %1307 = vmatprep.subr.bf16.mxu0 0
    %1308 = vmatpush2.bf16.msra.mxu0 0
    %1309 = vmatprep.subr.bf16.mxu0 0
    %1310 = vmatpush2.bf16.msra.mxu0 0
    %1311 = vmatprep.subr.bf16.mxu0 0
    %1312 = vmatpush2.bf16.msra.mxu0 0
    %1313 = vmatprep.subr.bf16.mxu0 0
    %1314 = vmatpush2.bf16.msra.mxu0 0
    %1315 = vmatprep.mubr.bf16.mxu0 0
    %1316 = vmatmul.mubr.bf16.gmra.mxu0 %v1241
    %v1317 = vpop.f32.mrf.mxu0
    %v1318 = vadd.f32 %v554, %v1317
    %v1319 = vpop.f32.mrf.mxu0
    %v1320 = vpop.f32.mrf.mxu0
    %v1321 = vpop.f32.mrf.mxu0
    %1322 = vdwg.mxu0
    %v1323 = vunpack.c.l.bf16 %v1239
    %v1324 = vunpack.c.h.bf16 %v1239
    %v1325 = vunpack.c.l.bf16 %v1240
    %v1326 = vadd.f32 %v1323, %v1277
    %v1327 = vxor.u32 %v1326, 2147483648
    %v1328 = vmul.f32 %v1327, 1.442695
    %v1329 = vpow.pop %v1328
    %v1330 = vadd.f32 %v1329, 1.0
    %v1331 = vrcp.pop %v1330
    %v1332 = vmul.f32 1.0, %v1331
    %v1333 = vadd.f32 %v1324, %v1279
    %v1334 = vxor.u32 %v1333, 2147483648
    %v1335 = vmul.f32 %v1334, 1.442695
    %v1336 = vpow.pop %v1335
    %v1337 = vadd.f32 %v1336, 1.0
    %v1338 = vrcp.pop %v1337
    %v1339 = vmul.f32 1.0, %v1338
    %v1340 = vmul.f32 %v1332, %v1318
    %v1341 = vadd.f32 %v1325, %v1340
    %v1342 = vtanh.pop %v1341
    %v1343 = vsub.f32 1.0, %v1339
    %v1344 = vmul.f32 %v1343, %v1342
    %v1345 = vmul.f32 %v1339, %v1238
    %v1346 = vadd.f32 %v1344, %v1345
    %vm1347 = vcmp.gt.s32.totalorder %v561, 5
    %v1348 = vsel %vm1347, %v1346, %v1238
    %v1349 = vld [vmem:[#allocation2 + $0x48] sm:$0xff]
    %v1350 = vld [vmem:[#allocation2 + $0x50] sm:$0xf]
    %v1351 = vpack.c.bf16 %v1348, %v1348
    %1352 = vmatprep.subr.bf16.mxu0 %v666
    %1353 = vmatpush1.bf16.msra.mxu0 %v665
    %1354 = vmatprep.subr.bf16.mxu0 %v663
    %1355 = vmatpush1.bf16.msra.mxu0 %v662
    %1356 = vmatprep.subr.bf16.mxu0 %v660
    %1357 = vmatpush1.bf16.msra.mxu0 %v659
    %1358 = vmatprep.subr.bf16.mxu0 %v657
    %1359 = vmatpush1.bf16.msra.mxu0 %v656
    %1360 = vmatprep.subr.bf16.mxu0 %v654
    %1361 = vmatpush1.bf16.msra.mxu0 %v653
    %1362 = vmatprep.subr.bf16.mxu0 %v651
    %1363 = vmatpush1.bf16.msra.mxu0 %v650
    %1364 = vmatprep.subr.bf16.mxu0 %v648
    %1365 = vmatpush1.bf16.msra.mxu0 %v647
    %1366 = vmatprep.subr.bf16.mxu0 %v645
    %1367 = vmatpush1.bf16.msra.mxu0 %v644
    %1368 = vmatprep.subr.bf16.mxu0 0
    %1369 = vmatpush2.bf16.msra.mxu0 0
    %1370 = vmatprep.subr.bf16.mxu0 0
    %1371 = vmatpush2.bf16.msra.mxu0 0
    %1372 = vmatprep.subr.bf16.mxu0 0
    %1373 = vmatpush2.bf16.msra.mxu0 0
    %1374 = vmatprep.subr.bf16.mxu0 0
    %1375 = vmatpush2.bf16.msra.mxu0 0
    %1376 = vmatprep.subr.bf16.mxu0 0
    %1377 = vmatpush2.bf16.msra.mxu0 0
    %1378 = vmatprep.subr.bf16.mxu0 0
    %1379 = vmatpush2.bf16.msra.mxu0 0
    %1380 = vmatprep.subr.bf16.mxu0 0
    %1381 = vmatpush2.bf16.msra.mxu0 0
    %1382 = vmatprep.subr.bf16.mxu0 0
    %1383 = vmatpush2.bf16.msra.mxu0 0
    %1384 = vmatprep.mubr.bf16.mxu0 0
    %1385 = vmatmul.mubr.bf16.gmra.mxu0 %v1351
    %v1386 = vpop.f32.mrf.mxu0
    %v1387 = vadd.f32 %v546, %v1386
    %v1388 = vpop.f32.mrf.mxu0
    %v1389 = vadd.f32 %v550, %v1388
    %v1390 = vpop.f32.mrf.mxu0
    %v1391 = vpop.f32.mrf.mxu0
    %1392 = vdwg.mxu0
    %1393 = vmatprep.subr.bf16.mxu0 0
    %1394 = vmatpush1.bf16.msra.mxu0 %v667
    %1395 = vmatprep.subr.bf16.mxu0 0
    %1396 = vmatpush1.bf16.msra.mxu0 %v664
    %1397 = vmatprep.subr.bf16.mxu0 0
    %1398 = vmatpush1.bf16.msra.mxu0 %v661
    %1399 = vmatprep.subr.bf16.mxu0 0
    %1400 = vmatpush1.bf16.msra.mxu0 %v658
    %1401 = vmatprep.subr.bf16.mxu0 0
    %1402 = vmatpush1.bf16.msra.mxu0 %v655
    %1403 = vmatprep.subr.bf16.mxu0 0
    %1404 = vmatpush1.bf16.msra.mxu0 %v652
    %1405 = vmatprep.subr.bf16.mxu0 0
    %1406 = vmatpush1.bf16.msra.mxu0 %v649
    %1407 = vmatprep.subr.bf16.mxu0 0
    %1408 = vmatpush1.bf16.msra.mxu0 %v646
    %1409 = vmatprep.subr.bf16.mxu0 0
    %1410 = vmatpush2.bf16.msra.mxu0 0
    %1411 = vmatprep.subr.bf16.mxu0 0
    %1412 = vmatpush2.bf16.msra.mxu0 0
    %1413 = vmatprep.subr.bf16.mxu0 0
    %1414 = vmatpush2.bf16.msra.mxu0 0
    %1415 = vmatprep.subr.bf16.mxu0 0
    %1416 = vmatpush2.bf16.msra.mxu0 0
    %1417 = vmatprep.subr.bf16.mxu0 0
    %1418 = vmatpush2.bf16.msra.mxu0 0
    %1419 = vmatprep.subr.bf16.mxu0 0
    %1420 = vmatpush2.bf16.msra.mxu0 0
    %1421 = vmatprep.subr.bf16.mxu0 0
    %1422 = vmatpush2.bf16.msra.mxu0 0
    %1423 = vmatprep.subr.bf16.mxu0 0
    %1424 = vmatpush2.bf16.msra.mxu0 0
    %1425 = vmatprep.mubr.bf16.mxu0 0
    %1426 = vmatmul.mubr.bf16.gmra.mxu0 %v1351
    %v1427 = vpop.f32.mrf.mxu0
    %v1428 = vadd.f32 %v554, %v1427
    %v1429 = vpop.f32.mrf.mxu0
    %v1430 = vpop.f32.mrf.mxu0
    %v1431 = vpop.f32.mrf.mxu0
    %1432 = vdwg.mxu0
    %v1433 = vunpack.c.l.bf16 %v1349
    %v1434 = vunpack.c.h.bf16 %v1349
    %v1435 = vunpack.c.l.bf16 %v1350
    %v1436 = vadd.f32 %v1433, %v1387
    %v1437 = vxor.u32 %v1436, 2147483648
    %v1438 = vmul.f32 %v1437, 1.442695
    %v1439 = vpow.pop %v1438
    %v1440 = vadd.f32 %v1439, 1.0
    %v1441 = vrcp.pop %v1440
    %v1442 = vmul.f32 1.0, %v1441
    %v1443 = vadd.f32 %v1434, %v1389
    %v1444 = vxor.u32 %v1443, 2147483648
    %v1445 = vmul.f32 %v1444, 1.442695
    %v1446 = vpow.pop %v1445
    %v1447 = vadd.f32 %v1446, 1.0
    %v1448 = vrcp.pop %v1447
    %v1449 = vmul.f32 1.0, %v1448
    %v1450 = vmul.f32 %v1442, %v1428
    %v1451 = vadd.f32 %v1435, %v1450
    %v1452 = vtanh.pop %v1451
    %v1453 = vsub.f32 1.0, %v1449
    %v1454 = vmul.f32 %v1453, %v1452
    %v1455 = vmul.f32 %v1449, %v1348
    %v1456 = vadd.f32 %v1454, %v1455
    %vm1457 = vcmp.gt.s32.totalorder %v561, 6
    %v1458 = vsel %vm1457, %v1456, %v1348
    %v1459 = vld [vmem:[#allocation2 + $0x54] sm:$0xff]
    %v1460 = vld [vmem:[#allocation2 + $0x5c] sm:$0xf]
    %v1461 = vpack.c.bf16 %v1458, %v1458
    %1462 = vmatprep.subr.bf16.mxu0 %v666
    %1463 = vmatpush1.bf16.msra.mxu0 %v665
    %1464 = vmatprep.subr.bf16.mxu0 %v663
    %1465 = vmatpush1.bf16.msra.mxu0 %v662
    %1466 = vmatprep.subr.bf16.mxu0 %v660
    %1467 = vmatpush1.bf16.msra.mxu0 %v659
    %1468 = vmatprep.subr.bf16.mxu0 %v657
    %1469 = vmatpush1.bf16.msra.mxu0 %v656
    %1470 = vmatprep.subr.bf16.mxu0 %v654
    %1471 = vmatpush1.bf16.msra.mxu0 %v653
    %1472 = vmatprep.subr.bf16.mxu0 %v651
    %1473 = vmatpush1.bf16.msra.mxu0 %v650
    %1474 = vmatprep.subr.bf16.mxu0 %v648
    %1475 = vmatpush1.bf16.msra.mxu0 %v647
    %1476 = vmatprep.subr.bf16.mxu0 %v645
    %1477 = vmatpush1.bf16.msra.mxu0 %v644
    %1478 = vmatprep.subr.bf16.mxu0 0
    %1479 = vmatpush2.bf16.msra.mxu0 0
    %1480 = vmatprep.subr.bf16.mxu0 0
    %1481 = vmatpush2.bf16.msra.mxu0 0
    %1482 = vmatprep.subr.bf16.mxu0 0
    %1483 = vmatpush2.bf16.msra.mxu0 0
    %1484 = vmatprep.subr.bf16.mxu0 0
    %1485 = vmatpush2.bf16.msra.mxu0 0
    %1486 = vmatprep.subr.bf16.mxu0 0
    %1487 = vmatpush2.bf16.msra.mxu0 0
    %1488 = vmatprep.subr.bf16.mxu0 0
    %1489 = vmatpush2.bf16.msra.mxu0 0
    %1490 = vmatprep.subr.bf16.mxu0 0
    %1491 = vmatpush2.bf16.msra.mxu0 0
    %1492 = vmatprep.subr.bf16.mxu0 0
    %1493 = vmatpush2.bf16.msra.mxu0 0
    %1494 = vmatprep.mubr.bf16.mxu0 0
    %1495 = vmatmul.mubr.bf16.gmra.mxu0 %v1461
    %v1496 = vpop.f32.mrf.mxu0
    %v1497 = vadd.f32 %v546, %v1496
    %v1498 = vpop.f32.mrf.mxu0
    %v1499 = vadd.f32 %v550, %v1498
    %v1500 = vpop.f32.mrf.mxu0
    %v1501 = vpop.f32.mrf.mxu0
    %1502 = vdwg.mxu0
    %1503 = vmatprep.subr.bf16.mxu0 0
    %1504 = vmatpush1.bf16.msra.mxu0 %v667
    %1505 = vmatprep.subr.bf16.mxu0 0
    %1506 = vmatpush1.bf16.msra.mxu0 %v664
    %1507 = vmatprep.subr.bf16.mxu0 0
    %1508 = vmatpush1.bf16.msra.mxu0 %v661
    %1509 = vmatprep.subr.bf16.mxu0 0
    %1510 = vmatpush1.bf16.msra.mxu0 %v658
    %1511 = vmatprep.subr.bf16.mxu0 0
    %1512 = vmatpush1.bf16.msra.mxu0 %v655
    %1513 = vmatprep.subr.bf16.mxu0 0
    %1514 = vmatpush1.bf16.msra.mxu0 %v652
    %1515 = vmatprep.subr.bf16.mxu0 0
    %1516 = vmatpush1.bf16.msra.mxu0 %v649
    %1517 = vmatprep.subr.bf16.mxu0 0
    %1518 = vmatpush1.bf16.msra.mxu0 %v646
    %1519 = vmatprep.subr.bf16.mxu0 0
    %1520 = vmatpush2.bf16.msra.mxu0 0
    %1521 = vmatprep.subr.bf16.mxu0 0
    %1522 = vmatpush2.bf16.msra.mxu0 0
    %1523 = vmatprep.subr.bf16.mxu0 0
    %1524 = vmatpush2.bf16.msra.mxu0 0
    %1525 = vmatprep.subr.bf16.mxu0 0
    %1526 = vmatpush2.bf16.msra.mxu0 0
    %1527 = vmatprep.subr.bf16.mxu0 0
    %1528 = vmatpush2.bf16.msra.mxu0 0
    %1529 = vmatprep.subr.bf16.mxu0 0
    %1530 = vmatpush2.bf16.msra.mxu0 0
    %1531 = vmatprep.subr.bf16.mxu0 0
    %1532 = vmatpush2.bf16.msra.mxu0 0
    %1533 = vmatprep.subr.bf16.mxu0 0
    %1534 = vmatpush2.bf16.msra.mxu0 0
    %1535 = vmatprep.mubr.bf16.mxu0 0
    %1536 = vmatmul.mubr.bf16.gmra.mxu0 %v1461
    %v1537 = vpop.f32.mrf.mxu0
    %v1538 = vadd.f32 %v554, %v1537
    %v1539 = vpop.f32.mrf.mxu0
    %v1540 = vpop.f32.mrf.mxu0
    %v1541 = vpop.f32.mrf.mxu0
    %1542 = vdwg.mxu0
    %v1543 = vunpack.c.l.bf16 %v1459
    %v1544 = vunpack.c.h.bf16 %v1459
    %v1545 = vunpack.c.l.bf16 %v1460
    %v1546 = vadd.f32 %v1543, %v1497
    %v1547 = vxor.u32 %v1546, 2147483648
    %v1548 = vmul.f32 %v1547, 1.442695
    %v1549 = vpow.pop %v1548
    %v1550 = vadd.f32 %v1549, 1.0
    %v1551 = vrcp.pop %v1550
    %v1552 = vmul.f32 1.0, %v1551
    %v1553 = vadd.f32 %v1544, %v1499
    %v1554 = vxor.u32 %v1553, 2147483648
    %v1555 = vmul.f32 %v1554, 1.442695
    %v1556 = vpow.pop %v1555
    %v1557 = vadd.f32 %v1556, 1.0
    %v1558 = vrcp.pop %v1557
    %v1559 = vmul.f32 1.0, %v1558
    %v1560 = vmul.f32 %v1552, %v1538
    %v1561 = vadd.f32 %v1545, %v1560
    %v1562 = vtanh.pop %v1561
    %v1563 = vsub.f32 1.0, %v1559
    %v1564 = vmul.f32 %v1563, %v1562
    %v1565 = vmul.f32 %v1559, %v1458
    %v1566 = vadd.f32 %v1564, %v1565
    %vm1567 = vcmp.gt.s32.totalorder %v561, 7
    %v1568 = vsel %vm1567, %v1566, %v1458
    %1569 = vst [vmem:[#allocation9] sm:$0xff] %v1568
    // Predicated region
    $region38: #{tpu_custom_call.1} parent=1 // pred_check
      _
    $region39: #{tpu_custom_call.1} parent=1 // pred_check_branch
      %1571 = sbr.rel (0) target = $region41
    $region40: #{tpu_custom_call.1} parent=1 // pred_region
      %s1573 = ssub.s32 128, 128
      %1574 = vsyncadd [#allocation5], %s1573
      %s1576 = sshll.u32 [#allocation9], 4
      %s1577 = int_to_ptr.vmem [resolvable:$true] %s1576
      %1579 = dma.vmem_to_hbm [thread:$0]  %s1577, 128, %s6, [#allocation5]
    $region41: #{tpu_custom_call.1} parent=1 // pred_fallthru
      _
    // Predicated region
    $region42: #{tpu_custom_call.1} parent=1 // pred_check
      _
    $region43: #{tpu_custom_call.1} parent=1 // pred_check_branch
      %1581 = sbr.rel (0) target = $region45
    $region44: #{tpu_custom_call.1} parent=1 // pred_region
      %1582 = dma.done [#allocation5], 128
    $region45: #{tpu_custom_call.1} parent=1 // pred_fallthru
      _
    %1583 = vsyncpa [#allocation4], 1
    %1584 = vsyncpa [#allocation7], 1
    %1585 = vsyncpa [#allocation5], 1

</llo_original>
